<compile_context>
chip_gen: v6e
topology: v6e:2x2x1
jax: 0.10.0
libtpu: 0.0.40
codegen_flags: <defaults>
</compile_context>

<pallas_src>
import functools

import jax
import jax.numpy as jnp
from jax import lax
from jax.experimental import pallas as pl
from jax.experimental.pallas import tpu as pltpu


# ------------------------------ Pallas kernel -------------------------------


def _encoder_kernel(x_ref, pw_ref, pb_ref, w_ref, b_ref, scales_ref,
                    o_ref, xp, *, num_blocks, num_layers):
    """Fused encoder for one batch element, lane-dense (H, W*C) layout.

      x_ref      : (1, H, W*Cin)
      pw_ref     : (W*Cin, W*Cout)      block-diag 1x1 projection
      pb_ref     : (1, W*Cout)
      w_ref      : (3*L, W*Cout, W*Cout) banded conv weights, 3 bands / layer
      b_ref      : (L, 1, W*Cout)
      scales_ref : (num_blocks,) in SMEM
      o_ref      : (1, H, W*Cout)
      xp         : (H+2, W*Cout) VMEM scratch (H halo rows)
    """
    H = o_ref.shape[1]

    # ---- 1x1 projection: one lane-dense MXU matmul -------------------------
    x = jnp.dot(x_ref[0], pw_ref[...],
                preferred_element_type=jnp.float32) + pb_ref[...]

    # Halo scratch: zero once per grid step; rows 0 and H+1 stay zero
    # (H zero-padding).  W zero-padding is folded into the banded weights.
    xp[...] = jnp.zeros(xp.shape, xp.dtype)

    # ---- scaling residual blocks -------------------------------------------
    for b in range(num_blocks):
        h_act = x
        for l in range(num_layers):
            li = b * num_layers + l
            # interior rows 1..H (halo rows stay zero)
            xp[1:H + 1, :] = h_act
            # 3x3 conv == 3 row-shifted (H, W*C) @ (W*C, W*C) matmuls
            acc = jnp.dot(h_act, w_ref[3 * li + 1],
                          preferred_element_type=jnp.float32)        # ky = 1
            acc += jnp.dot(xp[0:H, :], w_ref[3 * li + 0],
                           preferred_element_type=jnp.float32)       # ky = 0
            acc += jnp.dot(xp[2:H + 2, :], w_ref[3 * li + 2],
                           preferred_element_type=jnp.float32)       # ky = 2
            acc += b_ref[li]
            if l != num_layers - 1:
                acc = jnp.maximum(acc, 0.0)
            h_act = acc
        x = x + scales_ref[b] * h_act

    o_ref[0] = x.astype(o_ref.dtype)


# -------------------- wrapper: weight prep + pallas_call ---------------------


def _prep_params(params, W):
    """Fold conv weights into lane-dense banded-matmul form (tiny, done once).

    For activations flattened to (H, W*C):
      1x1 conv  -> kron(I_W, proj_w)                       : (W*Cin, W*Cout)
      3x3 conv  -> for each ky: sum_kx kron(D_{kx-1}, W[ky,kx])
                   where D_d is ones on the d-th sub-diagonal (drops the
                   out-of-range kx taps == zero-padding in W).
    """
    cin, cout = params["proj_w"].shape
    eye = jnp.eye(W, dtype=jnp.float32)
    bands, biases = [], []
    for blk in params["blocks"]:
        for (w, bvec) in blk["layers"]:
            for ky in range(3):
                bands.append(sum(
                    jnp.kron(jnp.eye(W, k=-(kx - 1), dtype=jnp.float32),
                             w[ky, kx])
                    for kx in range(3)))                           # (W*C, W*C)
            biases.append(jnp.tile(bvec, W).reshape(1, W * cout))
    return {
        "proj_w": jnp.kron(eye, params["proj_w"]),                 # (W*cin, W*cout)
        "proj_b": jnp.tile(params["proj_b"], W).reshape(1, W * cout),
        "bands": jnp.stack(bands),                                 # (3*L, W*C, W*C)
        "biases": jnp.stack(biases),                               # (L, 1, W*C)
        "scales": jnp.concatenate([blk["scale"] for blk in params["blocks"]]),
    }


def scaling_residual_encoder_forward(params, x_nchw):
    """Forward pass. Input NCHW (PyTorch convention), output NCHW."""
    N, Cin, H, W = x_nchw.shape
    cout = params["proj_w"].shape[1]
    num_blocks = len(params["blocks"])
    num_layers = len(params["blocks"][0]["layers"])
    L = num_blocks * num_layers

    prep = _prep_params(params, W)
    wcin, wcout = W * Cin, W * cout

    # NCHW -> NHWC -> lane-dense (N, H, W*C)  (free reshape of contiguous NHWC)
    x = jnp.transpose(x_nchw, (0, 2, 3, 1)).astype(jnp.float32)
    x = x.reshape(N, H, wcin)

    kern = functools.partial(_encoder_kernel,
                             num_blocks=num_blocks, num_layers=num_layers)

    out = pl.pallas_call(
        kern,
        out_shape=jax.ShapeDtypeStruct((N, H, wcout), jnp.float32),
        grid=(N,),
        in_specs=[
            pl.BlockSpec((1, H, wcin), lambda n: (n, 0, 0)),
            pl.BlockSpec((wcin, wcout), lambda n: (0, 0)),
            pl.BlockSpec((1, wcout), lambda n: (0, 0)),
            pl.BlockSpec((3 * L, wcout, wcout), lambda n: (0, 0, 0)),
            pl.BlockSpec((L, 1, wcout), lambda n: (0, 0, 0)),
            pl.BlockSpec(memory_space=pltpu.MemorySpace.SMEM),
        ],
        out_specs=pl.BlockSpec((1, H, wcout), lambda n: (n, 0, 0)),
        scratch_shapes=[pltpu.VMEM((H + 2, wcout), jnp.float32)],
        compiler_params=pltpu.CompilerParams(
            dimension_semantics=("parallel",),
            vmem_limit_bytes=32 * 1024 * 1024,
        ),
    )(x, prep["proj_w"], prep["proj_b"], prep["bands"], prep["biases"],
      prep["scales"])

    # (N, H, W*Cout) -> NHWC -> NCHW
    return jnp.transpose(out.reshape(N, H, W, cout), (0, 3, 1, 2))


# ---------------------- parameters + pure-JAX reference ----------------------


def init_params(key, in_channels, out_channels, num_blocks, num_layers):
    """Deterministic parameter init (He-style normal, fixed PRNG key)."""
    keys = jax.random.split(key, 2 + num_blocks * num_layers)
    params = {"proj_w": (jax.random.normal(keys[0],
                                           (in_channels, out_channels),
                                           jnp.float32)
                         * (2.0 / in_channels) ** 0.5),
              "proj_b": jnp.zeros((out_channels,), jnp.float32),
              "blocks": []}
    ki = 1
    for _ in range(num_blocks):
        layers = []
        for _ in range(num_layers):
            w = (jax.random.normal(keys[ki],
                                   (3, 3, out_channels, out_channels),
                                   jnp.float32)
                 * (2.0 / (9 * out_channels)) ** 0.5)
            layers.append((w, jnp.zeros((out_channels,), jnp.float32)))
            ki += 1
        params["blocks"].append({"layers": layers,
                                 "scale": jnp.array([0.1], jnp.float32)})
    return params


def _ref_forward(params, x_nchw):
    x = jnp.transpose(x_nchw, (0, 2, 3, 1)).astype(jnp.float32)
    x = jnp.einsum("nhwc,co->nhwo", x, params["proj_w"]) + params["proj_b"]
    dn = lax.conv_dimension_numbers(x.shape, (3, 3, 1, 1),
                                    ("NHWC", "HWIO", "NHWC"))
    for block in params["blocks"]:
        layers = block["layers"]
        h = x
        for li, (w, b) in enumerate(layers):
            h = lax.conv_general_dilated(h, w, (1, 1), "SAME",
                                         dimension_numbers=dn) + b
            if li != len(layers) - 1:
                h = jnp.maximum(h, 0.0)
        x = x + block["scale"][0] * h
    return jnp.transpose(x, (0, 3, 1, 2))


# ----------------------------------- main ------------------------------------


if __name__ == "__main__":
    # opt.latent_blocks = 2, opt.latent_layers = 2
    in_channels, out_channels = 4, 8
    num_blocks, num_layers = 2, 2
    N, H, W = 2, 16, 16

    key = jax.random.PRNGKey(0)
    pkey, xkey = jax.random.split(key)
    params = init_params(pkey, in_channels, out_channels,
                         num_blocks, num_layers)
    x = jax.random.normal(xkey, (N, in_channels, H, W), jnp.float32)  # NCHW

    fwd = jax.jit(scaling_residual_encoder_forward)
    out = jax.block_until_ready(fwd(params, x))

    ref = jax.block_until_ready(_ref_forward(params, x))
    assert out.shape == (N, out_channels, H, W)
    max_err = float(jnp.max(jnp.abs(out - ref)))
    assert jnp.allclose(out, ref, atol=2e-4, rtol=2e-4), max_err

    print("KERNEL_OK")
</pallas_src>

<mosaic_0001>
module attributes {stable_mosaic.version = 11 : i64} {
  func.func @_encoder_kernel(%arg0: i32, %arg1: memref<1x16x64xf32, #tpu.memory_space<vmem>>, %arg2: memref<64x128xf32, #tpu.memory_space<vmem>>, %arg3: memref<1x128xf32, #tpu.memory_space<vmem>>, %arg4: memref<12x128x128xf32, #tpu.memory_space<vmem>>, %arg5: memref<4x1x128xf32, #tpu.memory_space<vmem>>, %arg6: memref<2xf32, #tpu.memory_space<smem>>, %arg7: memref<1x16x128xf32, #tpu.memory_space<vmem>>, %arg8: memref<18x128xf32, #tpu.memory_space<vmem>>) attributes {dimension_semantics = [#tpu.dimension_semantics<parallel>], iteration_bounds = array<i64: 2>, scalar_prefetch = 0 : i64, scratch_operands = 1 : i64, tpu.core_type = #tpu.core_type<tc>, window_params = [{transform_indices = @transform_0, window_bounds = array<i64: 1, 16, 64>}, {pipeline_mode = #tpu.pipeline_mode<synchronous>, transform_indices = @transform_1, window_bounds = array<i64: 64, 128>}, {pipeline_mode = #tpu.pipeline_mode<synchronous>, transform_indices = @transform_2, window_bounds = array<i64: 1, 128>}, {pipeline_mode = #tpu.pipeline_mode<synchronous>, transform_indices = @transform_3, window_bounds = array<i64: 12, 128, 128>}, {pipeline_mode = #tpu.pipeline_mode<synchronous>, transform_indices = @transform_4, window_bounds = array<i64: 4, 1, 128>}, {transform_indices = @transform_5, window_bounds = array<i64: 2>}, {transform_indices = @transform_6, window_bounds = array<i64: 1, 16, 128>}]} {
    %c0 = arith.constant 0 : index
    %c0_0 = arith.constant 0 : index
    %c0_1 = arith.constant 0 : index
    %0 = vector.load %arg1[%c0, %c0_0, %c0_1] : memref<1x16x64xf32, #tpu.memory_space<vmem>>, vector<1x16x64xf32>
    %1 = vector.shape_cast %0 : vector<1x16x64xf32> to vector<16x64xf32>
    %c0_2 = arith.constant 0 : index
    %c0_3 = arith.constant 0 : index
    %2 = vector.load %arg2[%c0_2, %c0_3] : memref<64x128xf32, #tpu.memory_space<vmem>>, vector<64x128xf32>
    %cst = arith.constant dense<0.000000e+00> : vector<16x128xf32>
    %3 = tpu.matmul %1, %2, %cst {dimension_numbers = #tpu.dot_dimension_numbers<[1], [0], [0], [1], [0, 0, 1, 1], [], []>} : vector<16x64xf32>, vector<64x128xf32>, vector<16x128xf32> -> vector<16x128xf32>
    %c0_4 = arith.constant 0 : index
    %c0_5 = arith.constant 0 : index
    %4 = vector.load %arg3[%c0_4, %c0_5] : memref<1x128xf32, #tpu.memory_space<vmem>>, vector<1x128xf32>
    %5 = vector.broadcast %4 : vector<1x128xf32> to vector<16x128xf32>
    %6 = arith.addf %3, %5 : vector<16x128xf32>
    %cst_6 = arith.constant 0.000000e+00 : f32
    %7 = vector.broadcast %cst_6 : f32 to vector<18x128xf32>
    %c0_7 = arith.constant 0 : index
    %c0_8 = arith.constant 0 : index
    %8 = vector.load %arg8[%c0_7, %c0_8] : memref<18x128xf32, #tpu.memory_space<vmem>>, vector<18x128xf32>
    tpu.vector_store %arg8[%c0_7, %c0_8], %7 {strides = array<i32>} : memref<18x128xf32, #tpu.memory_space<vmem>>, vector<18x128xf32>,
    %c1 = arith.constant 1 : index
    %c0_9 = arith.constant 0 : index
    %9 = vector.load %arg8[%c1, %c0_9] : memref<18x128xf32, #tpu.memory_space<vmem>>, vector<16x128xf32>
    tpu.vector_store %arg8[%c1, %c0_9], %6 {strides = array<i32>} : memref<18x128xf32, #tpu.memory_space<vmem>>, vector<16x128xf32>,
    %c1_10 = arith.constant 1 : index
    %c0_11 = arith.constant 0 : index
    %c0_12 = arith.constant 0 : index
    %10 = vector.load %arg4[%c1_10, %c0_11, %c0_12] : memref<12x128x128xf32, #tpu.memory_space<vmem>>, vector<1x128x128xf32>
    %11 = vector.shape_cast %10 : vector<1x128x128xf32> to vector<128x128xf32>
    %cst_13 = arith.constant dense<0.000000e+00> : vector<16x128xf32>
    %12 = tpu.matmul %6, %11, %cst_13 {dimension_numbers = #tpu.dot_dimension_numbers<[1], [0], [0], [1], [0, 0, 1, 1], [], []>} : vector<16x128xf32>, vector<128x128xf32>, vector<16x128xf32> -> vector<16x128xf32>
    %c0_14 = arith.constant 0 : index
    %c0_15 = arith.constant 0 : index
    %13 = vector.load %arg8[%c0_14, %c0_15] : memref<18x128xf32, #tpu.memory_space<vmem>>, vector<16x128xf32>
    %c0_16 = arith.constant 0 : index
    %c0_17 = arith.constant 0 : index
    %c0_18 = arith.constant 0 : index
    %14 = vector.load %arg4[%c0_16, %c0_17, %c0_18] : memref<12x128x128xf32, #tpu.memory_space<vmem>>, vector<1x128x128xf32>
    %15 = vector.shape_cast %14 : vector<1x128x128xf32> to vector<128x128xf32>
    %cst_19 = arith.constant dense<0.000000e+00> : vector<16x128xf32>
    %16 = tpu.matmul %13, %15, %cst_19 {dimension_numbers = #tpu.dot_dimension_numbers<[1], [0], [0], [1], [0, 0, 1, 1], [], []>} : vector<16x128xf32>, vector<128x128xf32>, vector<16x128xf32> -> vector<16x128xf32>
    %17 = arith.addf %12, %16 : vector<16x128xf32>
    %c2 = arith.constant 2 : index
    %c0_20 = arith.constant 0 : index
    %18 = vector.load %arg8[%c2, %c0_20] : memref<18x128xf32, #tpu.memory_space<vmem>>, vector<16x128xf32>
    %c2_21 = arith.constant 2 : index
    %c0_22 = arith.constant 0 : index
    %c0_23 = arith.constant 0 : index
    %19 = vector.load %arg4[%c2_21, %c0_22, %c0_23] : memref<12x128x128xf32, #tpu.memory_space<vmem>>, vector<1x128x128xf32>
    %20 = vector.shape_cast %19 : vector<1x128x128xf32> to vector<128x128xf32>
    %cst_24 = arith.constant dense<0.000000e+00> : vector<16x128xf32>
    %21 = tpu.matmul %18, %20, %cst_24 {dimension_numbers = #tpu.dot_dimension_numbers<[1], [0], [0], [1], [0, 0, 1, 1], [], []>} : vector<16x128xf32>, vector<128x128xf32>, vector<16x128xf32> -> vector<16x128xf32>
    %22 = arith.addf %17, %21 : vector<16x128xf32>
    %c0_25 = arith.constant 0 : index
    %c0_26 = arith.constant 0 : index
    %c0_27 = arith.constant 0 : index
    %23 = vector.load %arg5[%c0_25, %c0_26, %c0_27] : memref<4x1x128xf32, #tpu.memory_space<vmem>>, vector<1x1x128xf32>
    %24 = vector.shape_cast %23 : vector<1x1x128xf32> to vector<1x128xf32>
    %25 = vector.broadcast %24 : vector<1x128xf32> to vector<16x128xf32>
    %26 = arith.addf %22, %25 : vector<16x128xf32>
    %cst_28 = arith.constant 0.000000e+00 : f32
    %27 = vector.broadcast %cst_28 : f32 to vector<16x128xf32>
    %28 = arith.maximumf %26, %27 : vector<16x128xf32>
    %c1_29 = arith.constant 1 : index
    %c0_30 = arith.constant 0 : index
    %29 = vector.load %arg8[%c1_29, %c0_30] : memref<18x128xf32, #tpu.memory_space<vmem>>, vector<16x128xf32>
    tpu.vector_store %arg8[%c1_29, %c0_30], %28 {strides = array<i32>} : memref<18x128xf32, #tpu.memory_space<vmem>>, vector<16x128xf32>,
    %c4 = arith.constant 4 : index
    %c0_31 = arith.constant 0 : index
    %c0_32 = arith.constant 0 : index
    %30 = vector.load %arg4[%c4, %c0_31, %c0_32] : memref<12x128x128xf32, #tpu.memory_space<vmem>>, vector<1x128x128xf32>
    %31 = vector.shape_cast %30 : vector<1x128x128xf32> to vector<128x128xf32>
    %cst_33 = arith.constant dense<0.000000e+00> : vector<16x128xf32>
    %32 = tpu.matmul %28, %31, %cst_33 {dimension_numbers = #tpu.dot_dimension_numbers<[1], [0], [0], [1], [0, 0, 1, 1], [], []>} : vector<16x128xf32>, vector<128x128xf32>, vector<16x128xf32> -> vector<16x128xf32>
    %c0_34 = arith.constant 0 : index
    %c0_35 = arith.constant 0 : index
    %33 = vector.load %arg8[%c0_34, %c0_35] : memref<18x128xf32, #tpu.memory_space<vmem>>, vector<16x128xf32>
    %c3 = arith.constant 3 : index
    %c0_36 = arith.constant 0 : index
    %c0_37 = arith.constant 0 : index
    %34 = vector.load %arg4[%c3, %c0_36, %c0_37] : memref<12x128x128xf32, #tpu.memory_space<vmem>>, vector<1x128x128xf32>
    %35 = vector.shape_cast %34 : vector<1x128x128xf32> to vector<128x128xf32>
    %cst_38 = arith.constant dense<0.000000e+00> : vector<16x128xf32>
    %36 = tpu.matmul %33, %35, %cst_38 {dimension_numbers = #tpu.dot_dimension_numbers<[1], [0], [0], [1], [0, 0, 1, 1], [], []>} : vector<16x128xf32>, vector<128x128xf32>, vector<16x128xf32> -> vector<16x128xf32>
    %37 = arith.addf %32, %36 : vector<16x128xf32>
    %c2_39 = arith.constant 2 : index
    %c0_40 = arith.constant 0 : index
    %38 = vector.load %arg8[%c2_39, %c0_40] : memref<18x128xf32, #tpu.memory_space<vmem>>, vector<16x128xf32>
    %c5 = arith.constant 5 : index
    %c0_41 = arith.constant 0 : index
    %c0_42 = arith.constant 0 : index
    %39 = vector.load %arg4[%c5, %c0_41, %c0_42] : memref<12x128x128xf32, #tpu.memory_space<vmem>>, vector<1x128x128xf32>
    %40 = vector.shape_cast %39 : vector<1x128x128xf32> to vector<128x128xf32>
    %cst_43 = arith.constant dense<0.000000e+00> : vector<16x128xf32>
    %41 = tpu.matmul %38, %40, %cst_43 {dimension_numbers = #tpu.dot_dimension_numbers<[1], [0], [0], [1], [0, 0, 1, 1], [], []>} : vector<16x128xf32>, vector<128x128xf32>, vector<16x128xf32> -> vector<16x128xf32>
    %42 = arith.addf %37, %41 : vector<16x128xf32>
    %c1_44 = arith.constant 1 : index
    %c0_45 = arith.constant 0 : index
    %c0_46 = arith.constant 0 : index
    %43 = vector.load %arg5[%c1_44, %c0_45, %c0_46] : memref<4x1x128xf32, #tpu.memory_space<vmem>>, vector<1x1x128xf32>
    %44 = vector.shape_cast %43 : vector<1x1x128xf32> to vector<1x128xf32>
    %45 = vector.broadcast %44 : vector<1x128xf32> to vector<16x128xf32>
    %46 = arith.addf %42, %45 : vector<16x128xf32>
    %c0_47 = arith.constant 0 : index
    %47 = memref.load %arg6[%c0_47] : memref<2xf32, #tpu.memory_space<smem>>
    %48 = vector.broadcast %47 : f32 to vector<16x128xf32>
    %49 = arith.mulf %48, %46 : vector<16x128xf32>
    %50 = arith.addf %6, %49 : vector<16x128xf32>
    %c1_48 = arith.constant 1 : index
    %c0_49 = arith.constant 0 : index
    %51 = vector.load %arg8[%c1_48, %c0_49] : memref<18x128xf32, #tpu.memory_space<vmem>>, vector<16x128xf32>
    tpu.vector_store %arg8[%c1_48, %c0_49], %50 {strides = array<i32>} : memref<18x128xf32, #tpu.memory_space<vmem>>, vector<16x128xf32>,
    %c7 = arith.constant 7 : index
    %c0_50 = arith.constant 0 : index
    %c0_51 = arith.constant 0 : index
    %52 = vector.load %arg4[%c7, %c0_50, %c0_51] : memref<12x128x128xf32, #tpu.memory_space<vmem>>, vector<1x128x128xf32>
    %53 = vector.shape_cast %52 : vector<1x128x128xf32> to vector<128x128xf32>
    %cst_52 = arith.constant dense<0.000000e+00> : vector<16x128xf32>
    %54 = tpu.matmul %50, %53, %cst_52 {dimension_numbers = #tpu.dot_dimension_numbers<[1], [0], [0], [1], [0, 0, 1, 1], [], []>} : vector<16x128xf32>, vector<128x128xf32>, vector<16x128xf32> -> vector<16x128xf32>
    %c0_53 = arith.constant 0 : index
    %c0_54 = arith.constant 0 : index
    %55 = vector.load %arg8[%c0_53, %c0_54] : memref<18x128xf32, #tpu.memory_space<vmem>>, vector<16x128xf32>
    %c6 = arith.constant 6 : index
    %c0_55 = arith.constant 0 : index
    %c0_56 = arith.constant 0 : index
    %56 = vector.load %arg4[%c6, %c0_55, %c0_56] : memref<12x128x128xf32, #tpu.memory_space<vmem>>, vector<1x128x128xf32>
    %57 = vector.shape_cast %56 : vector<1x128x128xf32> to vector<128x128xf32>
    %cst_57 = arith.constant dense<0.000000e+00> : vector<16x128xf32>
    %58 = tpu.matmul %55, %57, %cst_57 {dimension_numbers = #tpu.dot_dimension_numbers<[1], [0], [0], [1], [0, 0, 1, 1], [], []>} : vector<16x128xf32>, vector<128x128xf32>, vector<16x128xf32> -> vector<16x128xf32>
    %59 = arith.addf %54, %58 : vector<16x128xf32>
    %c2_58 = arith.constant 2 : index
    %c0_59 = arith.constant 0 : index
    %60 = vector.load %arg8[%c2_58, %c0_59] : memref<18x128xf32, #tpu.memory_space<vmem>>, vector<16x128xf32>
    %c8 = arith.constant 8 : index
    %c0_60 = arith.constant 0 : index
    %c0_61 = arith.constant 0 : index
    %61 = vector.load %arg4[%c8, %c0_60, %c0_61] : memref<12x128x128xf32, #tpu.memory_space<vmem>>, vector<1x128x128xf32>
    %62 = vector.shape_cast %61 : vector<1x128x128xf32> to vector<128x128xf32>
    %cst_62 = arith.constant dense<0.000000e+00> : vector<16x128xf32>
    %63 = tpu.matmul %60, %62, %cst_62 {dimension_numbers = #tpu.dot_dimension_numbers<[1], [0], [0], [1], [0, 0, 1, 1], [], []>} : vector<16x128xf32>, vector<128x128xf32>, vector<16x128xf32> -> vector<16x128xf32>
    %64 = arith.addf %59, %63 : vector<16x128xf32>
    %c2_63 = arith.constant 2 : index
    %c0_64 = arith.constant 0 : index
    %c0_65 = arith.constant 0 : index
    %65 = vector.load %arg5[%c2_63, %c0_64, %c0_65] : memref<4x1x128xf32, #tpu.memory_space<vmem>>, vector<1x1x128xf32>
    %66 = vector.shape_cast %65 : vector<1x1x128xf32> to vector<1x128xf32>
    %67 = vector.broadcast %66 : vector<1x128xf32> to vector<16x128xf32>
    %68 = arith.addf %64, %67 : vector<16x128xf32>
    %cst_66 = arith.constant 0.000000e+00 : f32
    %69 = vector.broadcast %cst_66 : f32 to vector<16x128xf32>
    %70 = arith.maximumf %68, %69 : vector<16x128xf32>
    %c1_67 = arith.constant 1 : index
    %c0_68 = arith.constant 0 : index
    %71 = vector.load %arg8[%c1_67, %c0_68] : memref<18x128xf32, #tpu.memory_space<vmem>>, vector<16x128xf32>
    tpu.vector_store %arg8[%c1_67, %c0_68], %70 {strides = array<i32>} : memref<18x128xf32, #tpu.memory_space<vmem>>, vector<16x128xf32>,
    %c10 = arith.constant 10 : index
    %c0_69 = arith.constant 0 : index
    %c0_70 = arith.constant 0 : index
    %72 = vector.load %arg4[%c10, %c0_69, %c0_70] : memref<12x128x128xf32, #tpu.memory_space<vmem>>, vector<1x128x128xf32>
    %73 = vector.shape_cast %72 : vector<1x128x128xf32> to vector<128x128xf32>
    %cst_71 = arith.constant dense<0.000000e+00> : vector<16x128xf32>
    %74 = tpu.matmul %70, %73, %cst_71 {dimension_numbers = #tpu.dot_dimension_numbers<[1], [0], [0], [1], [0, 0, 1, 1], [], []>} : vector<16x128xf32>, vector<128x128xf32>, vector<16x128xf32> -> vector<16x128xf32>
    %c0_72 = arith.constant 0 : index
    %c0_73 = arith.constant 0 : index
    %75 = vector.load %arg8[%c0_72, %c0_73] : memref<18x128xf32, #tpu.memory_space<vmem>>, vector<16x128xf32>
    %c9 = arith.constant 9 : index
    %c0_74 = arith.constant 0 : index
    %c0_75 = arith.constant 0 : index
    %76 = vector.load %arg4[%c9, %c0_74, %c0_75] : memref<12x128x128xf32, #tpu.memory_space<vmem>>, vector<1x128x128xf32>
    %77 = vector.shape_cast %76 : vector<1x128x128xf32> to vector<128x128xf32>
    %cst_76 = arith.constant dense<0.000000e+00> : vector<16x128xf32>
    %78 = tpu.matmul %75, %77, %cst_76 {dimension_numbers = #tpu.dot_dimension_numbers<[1], [0], [0], [1], [0, 0, 1, 1], [], []>} : vector<16x128xf32>, vector<128x128xf32>, vector<16x128xf32> -> vector<16x128xf32>
    %79 = arith.addf %74, %78 : vector<16x128xf32>
    %c2_77 = arith.constant 2 : index
    %c0_78 = arith.constant 0 : index
    %80 = vector.load %arg8[%c2_77, %c0_78] : memref<18x128xf32, #tpu.memory_space<vmem>>, vector<16x128xf32>
    %c11 = arith.constant 11 : index
    %c0_79 = arith.constant 0 : index
    %c0_80 = arith.constant 0 : index
    %81 = vector.load %arg4[%c11, %c0_79, %c0_80] : memref<12x128x128xf32, #tpu.memory_space<vmem>>, vector<1x128x128xf32>
    %82 = vector.shape_cast %81 : vector<1x128x128xf32> to vector<128x128xf32>
    %cst_81 = arith.constant dense<0.000000e+00> : vector<16x128xf32>
    %83 = tpu.matmul %80, %82, %cst_81 {dimension_numbers = #tpu.dot_dimension_numbers<[1], [0], [0], [1], [0, 0, 1, 1], [], []>} : vector<16x128xf32>, vector<128x128xf32>, vector<16x128xf32> -> vector<16x128xf32>
    %84 = arith.addf %79, %83 : vector<16x128xf32>
    %c3_82 = arith.constant 3 : index
    %c0_83 = arith.constant 0 : index
    %c0_84 = arith.constant 0 : index
    %85 = vector.load %arg5[%c3_82, %c0_83, %c0_84] : memref<4x1x128xf32, #tpu.memory_space<vmem>>, vector<1x1x128xf32>
    %86 = vector.shape_cast %85 : vector<1x1x128xf32> to vector<1x128xf32>
    %87 = vector.broadcast %86 : vector<1x128xf32> to vector<16x128xf32>
    %88 = arith.addf %84, %87 : vector<16x128xf32>
    %c1_85 = arith.constant 1 : index
    %89 = memref.load %arg6[%c1_85] : memref<2xf32, #tpu.memory_space<smem>>
    %90 = vector.broadcast %89 : f32 to vector<16x128xf32>
    %91 = arith.mulf %90, %88 : vector<16x128xf32>
    %92 = arith.addf %50, %91 : vector<16x128xf32>
    %c0_86 = arith.constant 0 : index
    %c0_87 = arith.constant 0 : index
    %c0_88 = arith.constant 0 : index
    %93 = vector.load %arg7[%c0_86, %c0_87, %c0_88] : memref<1x16x128xf32, #tpu.memory_space<vmem>>, vector<1x16x128xf32>
    %94 = vector.shape_cast %93 : vector<1x16x128xf32> to vector<16x128xf32>
    %95 = vector.shape_cast %92 : vector<16x128xf32> to vector<1x16x128xf32>
    tpu.vector_store %arg7[%c0_86, %c0_87, %c0_88], %95 {strides = array<i32>} : memref<1x16x128xf32, #tpu.memory_space<vmem>>, vector<1x16x128xf32>,
    return
  }
  func.func @transform_0(%arg0: i32) -> (i32, i32, i32) {
    %c0_i32 = arith.constant 0 : i32
    %c0_i32_0 = arith.constant 0 : i32
    %c0_i32_1 = arith.constant 0 : i32
    return %arg0, %c0_i32, %c0_i32_0 : i32, i32, i32
  }
  func.func @transform_1(%arg0: i32) -> (i32, i32) {
    %c0_i32 = arith.constant 0 : i32
    %c0_i32_0 = arith.constant 0 : i32
    %c0_i32_1 = arith.constant 0 : i32
    return %c0_i32, %c0_i32_0 : i32, i32
  }
  func.func @transform_2(%arg0: i32) -> (i32, i32) {
    %c0_i32 = arith.constant 0 : i32
    %c0_i32_0 = arith.constant 0 : i32
    %c0_i32_1 = arith.constant 0 : i32
    return %c0_i32, %c0_i32_0 : i32, i32
  }
  func.func @transform_3(%arg0: i32) -> (i32, i32, i32) {
    %c0_i32 = arith.constant 0 : i32
    %c0_i32_0 = arith.constant 0 : i32
    %c0_i32_1 = arith.constant 0 : i32
    %c0_i32_2 = arith.constant 0 : i32
    return %c0_i32, %c0_i32_0, %c0_i32_1 : i32, i32, i32
  }
  func.func @transform_4(%arg0: i32) -> (i32, i32, i32) {
    %c0_i32 = arith.constant 0 : i32
    %c0_i32_0 = arith.constant 0 : i32
    %c0_i32_1 = arith.constant 0 : i32
    %c0_i32_2 = arith.constant 0 : i32
    return %c0_i32, %c0_i32_0, %c0_i32_1 : i32, i32, i32
  }
  func.func @transform_5(%arg0: i32) -> i32 {
    %c0_i32 = arith.constant 0 : i32
    %c0_i32_0 = arith.constant 0 : i32
    return %c0_i32 : i32
  }
  func.func @transform_6(%arg0: i32) -> (i32, i32, i32) {
    %c0_i32 = arith.constant 0 : i32
    %c0_i32_0 = arith.constant 0 : i32
    %c0_i32_1 = arith.constant 0 : i32
    return %arg0, %c0_i32, %c0_i32_0 : i32, i32, i32
  }
}

</mosaic_0001>

<llo_original>
// kernel: tile.28
$region0: #{tile.28}
  #allocation0 [shape = 's32[1]{0}', space=sflag, size = 0x4, scoped, tag = 'scoped memory for tile.28']
  %s0 = inlined_call_operand.vmem [shape: f32[8], index: 0, kind: input, shape index: {}]
  %s1 = inlined_call_operand.vmem [shape: f32[16,8], index: 1, kind: output, shape index: {}]
  // Predicated region
  $region2: #{tile.28} parent=0 // pred_check
    _
  $region3: #{tile.28} parent=0 // pred_check_branch
    %3 = sbr.rel (0) target = $region5
  $region4: #{tile.28} parent=0 // pred_region
    _
  $region5: #{tile.28} parent=0 // pred_fallthru
    _
  %v4 = vld [vmem:[%s0] ss:$0 sm:$0xff]
  %5 = vst [vmem:[%s1] sm:$0xff] %v4
  %s6 = scalar_lea.vmem %s1, 8
  %7 = vst [vmem:[%s6] sm:$0xff] %v4

// kernel: tile.46
$region0: #{tile.46}
  %s0 = inlined_call_operand.vmem [shape: f32[16,8], index: 0, kind: input, shape index: {}]
  %s1 = inlined_call_operand.vmem [shape: f32[1,1,128], index: 1, kind: output, shape index: {}]
  $region1: #{tile.46} parent=0
    #allocation0 [shape = 'u8[4096]{0}', space=vmem, size = 0x1000, scoped, tag = 'scoped mem for output reshape']
    %v2 = vld [vmem:[%s0] sm:$0x1]
    %vm3 = vcmask 64512
    %4 = vst.msk [vmem:[#allocation0] sm:$0x1] %vm3, %v2
    %s5 = scalar_lea.vmem %s0, 15
    %v6 = vld [vmem:[%s5] sm:$0x1]
    %7 = vrot.lane.b32.xlu0 %v6, 120
    %v8 = vpop.permute.xlu0 %7
    %vm9 = vcmask 1048512
    %10 = vst.msk [vmem:[#allocation0] sm:$0x1] %vm9, %v8
    %s11 = scalar_lea.vmem %s0, 14
    %v12 = vld [vmem:[%s11] sm:$0x1]
    %13 = vrot.lane.b32.xlu0 %v12, 112
    %v14 = vpop.permute.xlu0 %13
    %vm15 = vcmask 982912
    %16 = vst.msk [vmem:[#allocation0] sm:$0x1] %vm15, %v14
    %s17 = scalar_lea.vmem %s0, 13
    %v18 = vld [vmem:[%s17] sm:$0x1]
    %19 = vrot.lane.b32.xlu0 %v18, 104
    %v20 = vpop.permute.xlu0 %19
    %vm21 = vcmask 917312
    %22 = vst.msk [vmem:[#allocation0] sm:$0x1] %vm21, %v20
    %s23 = scalar_lea.vmem %s0, 12
    %v24 = vld [vmem:[%s23] sm:$0x1]
    %25 = vrot.lane.b32.xlu0 %v24, 96
    %v26 = vpop.permute.xlu0 %25
    %vm27 = vcmask 851712
    %28 = vst.msk [vmem:[#allocation0] sm:$0x1] %vm27, %v26
    %s29 = scalar_lea.vmem %s0, 11
    %v30 = vld [vmem:[%s29] sm:$0x1]
    %31 = vrot.lane.b32.xlu0 %v30, 88
    %v32 = vpop.permute.xlu0 %31
    %vm33 = vcmask 786112
    %34 = vst.msk [vmem:[#allocation0] sm:$0x1] %vm33, %v32
    %s35 = scalar_lea.vmem %s0, 10
    %v36 = vld [vmem:[%s35] sm:$0x1]
    %37 = vrot.lane.b32.xlu0 %v36, 80
    %v38 = vpop.permute.xlu0 %37
    %vm39 = vcmask 720512
    %40 = vst.msk [vmem:[#allocation0] sm:$0x1] %vm39, %v38
    %s41 = scalar_lea.vmem %s0, 9
    %v42 = vld [vmem:[%s41] sm:$0x1]
    %43 = vrot.lane.b32.xlu0 %v42, 72
    %v44 = vpop.permute.xlu0 %43
    %vm45 = vcmask 654912
    %46 = vst.msk [vmem:[#allocation0] sm:$0x1] %vm45, %v44
    %s47 = scalar_lea.vmem %s0, 8
    %v48 = vld [vmem:[%s47] sm:$0x1]
    %49 = vrot.lane.b32.xlu0 %v48, 64
    %v50 = vpop.permute.xlu0 %49
    %vm51 = vcmask 589312
    %52 = vst.msk [vmem:[#allocation0] sm:$0x1] %vm51, %v50
    %s53 = scalar_lea.vmem %s0, 7
    %v54 = vld [vmem:[%s53] sm:$0x1]
    %55 = vrot.lane.b32.xlu0 %v54, 56
    %v56 = vpop.permute.xlu0 %55
    %vm57 = vcmask 523712
    %58 = vst.msk [vmem:[#allocation0] sm:$0x1] %vm57, %v56
    %s59 = scalar_lea.vmem %s0, 6
    %v60 = vld [vmem:[%s59] sm:$0x1]
    %61 = vrot.lane.b32.xlu0 %v60, 48
    %v62 = vpop.permute.xlu0 %61
    %vm63 = vcmask 458112
    %64 = vst.msk [vmem:[#allocation0] sm:$0x1] %vm63, %v62
    %s65 = scalar_lea.vmem %s0, 5
    %v66 = vld [vmem:[%s65] sm:$0x1]
    %67 = vrot.lane.b32.xlu0 %v66, 40
    %v68 = vpop.permute.xlu0 %67
    %vm69 = vcmask 392512
    %70 = vst.msk [vmem:[#allocation0] sm:$0x1] %vm69, %v68
    %s71 = scalar_lea.vmem %s0, 4
    %v72 = vld [vmem:[%s71] sm:$0x1]
    %73 = vrot.lane.b32.xlu0 %v72, 32
    %v74 = vpop.permute.xlu0 %73
    %vm75 = vcmask 326912
    %76 = vst.msk [vmem:[#allocation0] sm:$0x1] %vm75, %v74
    %s77 = scalar_lea.vmem %s0, 3
    %v78 = vld [vmem:[%s77] sm:$0x1]
    %79 = vrot.lane.b32.xlu0 %v78, 24
    %v80 = vpop.permute.xlu0 %79
    %vm81 = vcmask 261312
    %82 = vst.msk [vmem:[#allocation0] sm:$0x1] %vm81, %v80
    %s83 = scalar_lea.vmem %s0, 2
    %v84 = vld [vmem:[%s83] sm:$0x1]
    %85 = vrot.lane.b32.xlu0 %v84, 16
    %v86 = vpop.permute.xlu0 %85
    %vm87 = vcmask 195712
    %88 = vst.msk [vmem:[#allocation0] sm:$0x1] %vm87, %v86
    %s89 = scalar_lea.vmem %s0, 1
    %v90 = vld [vmem:[%s89] sm:$0x1]
    %91 = vrot.lane.b32.xlu0 %v90, 8
    %v92 = vpop.permute.xlu0 %91
    %vm93 = vcmask 130112
    %94 = vst.msk [vmem:[#allocation0] sm:$0x1] %vm93, %v92
    %s96 = sshll.u32 1, 1
    %s97 = ssub.s32 %s96, 1
    %v99 = vld [vmem:[#allocation0] sm:%s97]
    %s100 = sshll.u32 1, 1
    %s101 = ssub.s32 %s100, 1
    %102 = vst [vmem:[%s1] sm:%s101] %v99

// kernel: tile.45
$region0: #{tile.45}
  %s0 = inlined_call_operand.vmem [shape: f32[16,8], index: 0, kind: input, shape index: {}]
  %s1 = inlined_call_operand.vmem [shape: f32[1,128], index: 1, kind: output, shape index: {}]
  $region1: #{tile.45} parent=0
    #allocation0 [shape = 'u8[4096]{0}', space=vmem, size = 0x1000, scoped, tag = 'scoped mem for output reshape']
    %v2 = vld [vmem:[%s0] sm:$0x1]
    %vm3 = vcmask 64512
    %4 = vst.msk [vmem:[#allocation0] sm:$0x1] %vm3, %v2
    %s5 = scalar_lea.vmem %s0, 15
    %v6 = vld [vmem:[%s5] sm:$0x1]
    %7 = vrot.lane.b32.xlu0 %v6, 120
    %v8 = vpop.permute.xlu0 %7
    %vm9 = vcmask 1048512
    %10 = vst.msk [vmem:[#allocation0] sm:$0x1] %vm9, %v8
    %s11 = scalar_lea.vmem %s0, 14
    %v12 = vld [vmem:[%s11] sm:$0x1]
    %13 = vrot.lane.b32.xlu0 %v12, 112
    %v14 = vpop.permute.xlu0 %13
    %vm15 = vcmask 982912
    %16 = vst.msk [vmem:[#allocation0] sm:$0x1] %vm15, %v14
    %s17 = scalar_lea.vmem %s0, 13
    %v18 = vld [vmem:[%s17] sm:$0x1]
    %19 = vrot.lane.b32.xlu0 %v18, 104
    %v20 = vpop.permute.xlu0 %19
    %vm21 = vcmask 917312
    %22 = vst.msk [vmem:[#allocation0] sm:$0x1] %vm21, %v20
    %s23 = scalar_lea.vmem %s0, 12
    %v24 = vld [vmem:[%s23] sm:$0x1]
    %25 = vrot.lane.b32.xlu0 %v24, 96
    %v26 = vpop.permute.xlu0 %25
    %vm27 = vcmask 851712
    %28 = vst.msk [vmem:[#allocation0] sm:$0x1] %vm27, %v26
    %s29 = scalar_lea.vmem %s0, 11
    %v30 = vld [vmem:[%s29] sm:$0x1]
    %31 = vrot.lane.b32.xlu0 %v30, 88
    %v32 = vpop.permute.xlu0 %31
    %vm33 = vcmask 786112
    %34 = vst.msk [vmem:[#allocation0] sm:$0x1] %vm33, %v32
    %s35 = scalar_lea.vmem %s0, 10
    %v36 = vld [vmem:[%s35] sm:$0x1]
    %37 = vrot.lane.b32.xlu0 %v36, 80
    %v38 = vpop.permute.xlu0 %37
    %vm39 = vcmask 720512
    %40 = vst.msk [vmem:[#allocation0] sm:$0x1] %vm39, %v38
    %s41 = scalar_lea.vmem %s0, 9
    %v42 = vld [vmem:[%s41] sm:$0x1]
    %43 = vrot.lane.b32.xlu0 %v42, 72
    %v44 = vpop.permute.xlu0 %43
    %vm45 = vcmask 654912
    %46 = vst.msk [vmem:[#allocation0] sm:$0x1] %vm45, %v44
    %s47 = scalar_lea.vmem %s0, 8
    %v48 = vld [vmem:[%s47] sm:$0x1]
    %49 = vrot.lane.b32.xlu0 %v48, 64
    %v50 = vpop.permute.xlu0 %49
    %vm51 = vcmask 589312
    %52 = vst.msk [vmem:[#allocation0] sm:$0x1] %vm51, %v50
    %s53 = scalar_lea.vmem %s0, 7
    %v54 = vld [vmem:[%s53] sm:$0x1]
    %55 = vrot.lane.b32.xlu0 %v54, 56
    %v56 = vpop.permute.xlu0 %55
    %vm57 = vcmask 523712
    %58 = vst.msk [vmem:[#allocation0] sm:$0x1] %vm57, %v56
    %s59 = scalar_lea.vmem %s0, 6
    %v60 = vld [vmem:[%s59] sm:$0x1]
    %61 = vrot.lane.b32.xlu0 %v60, 48
    %v62 = vpop.permute.xlu0 %61
    %vm63 = vcmask 458112
    %64 = vst.msk [vmem:[#allocation0] sm:$0x1] %vm63, %v62
    %s65 = scalar_lea.vmem %s0, 5
    %v66 = vld [vmem:[%s65] sm:$0x1]
    %67 = vrot.lane.b32.xlu0 %v66, 40
    %v68 = vpop.permute.xlu0 %67
    %vm69 = vcmask 392512
    %70 = vst.msk [vmem:[#allocation0] sm:$0x1] %vm69, %v68
    %s71 = scalar_lea.vmem %s0, 4
    %v72 = vld [vmem:[%s71] sm:$0x1]
    %73 = vrot.lane.b32.xlu0 %v72, 32
    %v74 = vpop.permute.xlu0 %73
    %vm75 = vcmask 326912
    %76 = vst.msk [vmem:[#allocation0] sm:$0x1] %vm75, %v74
    %s77 = scalar_lea.vmem %s0, 3
    %v78 = vld [vmem:[%s77] sm:$0x1]
    %79 = vrot.lane.b32.xlu0 %v78, 24
    %v80 = vpop.permute.xlu0 %79
    %vm81 = vcmask 261312
    %82 = vst.msk [vmem:[#allocation0] sm:$0x1] %vm81, %v80
    %s83 = scalar_lea.vmem %s0, 2
    %v84 = vld [vmem:[%s83] sm:$0x1]
    %85 = vrot.lane.b32.xlu0 %v84, 16
    %v86 = vpop.permute.xlu0 %85
    %vm87 = vcmask 195712
    %88 = vst.msk [vmem:[#allocation0] sm:$0x1] %vm87, %v86
    %s89 = scalar_lea.vmem %s0, 1
    %v90 = vld [vmem:[%s89] sm:$0x1]
    %91 = vrot.lane.b32.xlu0 %v90, 8
    %v92 = vpop.permute.xlu0 %91
    %vm93 = vcmask 130112
    %94 = vst.msk [vmem:[#allocation0] sm:$0x1] %vm93, %v92
    %s96 = sshll.u32 1, 1
    %s97 = ssub.s32 %s96, 1
    %v99 = vld [vmem:[#allocation0] sm:%s97]
    %s100 = sshll.u32 1, 1
    %s101 = ssub.s32 %s100, 1
    %102 = vst [vmem:[%s1] sm:%s101] %v99

// kernel: scaling_residual_encoder_forward.1
$region0: #{scaling_residual_encoder_forward.1}
  #allocation0 [shape = 'u32[]', space=smem, size = 0x4, offset = 0x4, fixed_abs, tag = 'smem constant byte address 0x4 - core index']
  #allocation1 [shape = 'u32[144,128]{1,0:T(1,128)}', space=vmem, size = 0x12000, scoped, tag = 'internal scratch']
  #allocation2 [shape = 'f32[18,128]{1,0:T(8,128)}', space=vmem, size = 0x3000, scoped, tag = 'scratch operand']
  %s0 = inlined_call_operand.vmem [shape: f32[2,16,64], index: 0, kind: input, shape index: {}]
  %s1 = inlined_call_operand.vmem [shape: f32[64,128], index: 1, kind: input, shape index: {}]
  %s2 = inlined_call_operand.vmem [shape: f32[1,128], index: 2, kind: input, shape index: {}]
  %s3 = inlined_call_operand.vmem [shape: f32[12,128,128], index: 3, kind: input, shape index: {}]
  %s4 = inlined_call_operand.vmem [shape: f32[4,1,128], index: 4, kind: input, shape index: {}]
  %s5 = inlined_call_operand.vmem [shape: f32[2], index: 5, kind: input, shape index: {}]
  %s6 = inlined_call_operand.vmem [shape: f32[2,16,128], index: 6, kind: output, shape index: {}]
  %s7 = sld [smem:[#allocation0]]
  $region61: #{scaling_residual_encoder_forward.1} parent=0
    _
  %s9 = ssub.s32 1, %s7
  %s10 = scalar_select 0, %s9, %s7
  $region1: #{scaling_residual_encoder_forward.1} parent=0
    #allocation3 [shape = 'u8[512]{0}', space=smem, size = 0x200, scoped, tag = 'input window, operand 5, single buffered']
    #allocation4 [shape = 's32[2]{0}', space=sflag, size = 0x8, scoped, tag = 'scoped memory for scaling_residual_encoder_forward.1']
    %11 = vsyncpa [#allocation4], 0
    loop: start=0, step=1, limit=4
    $region2: #{scaling_residual_encoder_forward.1} parent=1 // loop_pre_header
      _
    $region3: #{scaling_residual_encoder_forward.1} parent=1 // loop_header
      %s13 = sphi 0, %s17
      %p14 = scmp.ge.s32.totalorder %s13, 4
      %s23 = sphi 0, %s25
      %s26 = sphi 0, %s23
      %s27 = sphi 0, %s26
      %s43 = sphi 0, %s27
      %s47 = sphi 0, %s47
      %s49 = sphi 0, %s47
      %s50 = sphi 0, %s49
      %s64 = sphi 0, %s50
      %s68 = sphi 0, %s68
      %s70 = sphi 0, %s68
      %s71 = sphi 0, %s70
      %s85 = sphi 0, %s71
      %s89 = sphi 0, %s89
      %s91 = sphi 0, %s89
      %s92 = sphi 0, %s91
      %s106 = sphi 0, %s92
      %s110 = sphi 0, %s110
      %s112 = sphi 0, %s110
      %s113 = sphi 0, %s112
      %s127 = sphi 0, %s113
      %s131 = sphi 0, %s131
      %s133 = sphi 0, %s131
      %s134 = sphi 0, %s133
      %s148 = sphi 0, %s134
      %s154 = sphi 0, %s156
      %s157 = sphi 0, %s154
      %s158 = sphi 0, %s157
      %s174 = sphi 0, %s158
    $region4: #{scaling_residual_encoder_forward.1} parent=1 // loop_header_branch
      %16 = sbr.rel (%p14) target = $region8
    $region5: #{scaling_residual_encoder_forward.1} parent=1 // loop_body
      %s18 = ssub.s32 %s13, 1
      %s19 = ssub.s32 %s13, 2
      %s20 = sadd.s32 %s13, 1
      %s21 = ssub.s32 %s13, %s20
      %p22 = scmp.eq.s32.totalorder %s21, 0
      %s24 = sadd.s32 %s23, 1
      %s25 = scalar_select %p22, %s23, %s24
      %p28 = pneg %p22
      %p29 = scmp.eq.s32.totalorder %s13, 1
      %p30 = por %p28, %p29
      %p31 = scmp.ne.s32.totalorder %s23, %s26
      %p32 = scmp.eq.s32.totalorder %s13, 0
      %p33 = por %p31, %p32
      %p34 = scmp.ne.s32.totalorder %s23, %s26
      %p35 = scmp.eq.s32.totalorder %s18, 1
      %p36 = por %p34, %p35
      %p37 = scmp.ne.s32.totalorder %s26, %s27
      %p38 = scmp.eq.s32.totalorder %s18, 0
      %p39 = por %p37, %p38
      %p40 = scmp.ne.s32.totalorder %s26, %s27
      %p41 = scmp.eq.s32.totalorder %s19, 1
      %p42 = por %p40, %p41
      %p44 = scmp.ne.s32.totalorder %s27, %s43
      %p45 = scmp.eq.s32.totalorder %s19, 0
      %p46 = por %p44, %p45
      %s48 = sadd.s32 %s47, 1
      %p51 = scmp.eq.s32.totalorder %s13, 1
      %p52 = scmp.ne.s32.totalorder %s47, %s49
      %p53 = scmp.eq.s32.totalorder %s13, 0
      %p54 = por %p52, %p53
      %p55 = scmp.ne.s32.totalorder %s47, %s49
      %p56 = scmp.eq.s32.totalorder %s18, 1
      %p57 = por %p55, %p56
      %p58 = scmp.ne.s32.totalorder %s49, %s50
      %p59 = scmp.eq.s32.totalorder %s18, 0
      %p60 = por %p58, %p59
      %p61 = scmp.ne.s32.totalorder %s49, %s50
      %p62 = scmp.eq.s32.totalorder %s19, 1
      %p63 = por %p61, %p62
      %p65 = scmp.ne.s32.totalorder %s50, %s64
      %p66 = scmp.eq.s32.totalorder %s19, 0
      %p67 = por %p65, %p66
      %s69 = sadd.s32 %s68, 1
      %p72 = scmp.eq.s32.totalorder %s13, 1
      %p73 = scmp.ne.s32.totalorder %s68, %s70
      %p74 = scmp.eq.s32.totalorder %s13, 0
      %p75 = por %p73, %p74
      %p76 = scmp.ne.s32.totalorder %s68, %s70
      %p77 = scmp.eq.s32.totalorder %s18, 1
      %p78 = por %p76, %p77
      %p79 = scmp.ne.s32.totalorder %s70, %s71
      %p80 = scmp.eq.s32.totalorder %s18, 0
      %p81 = por %p79, %p80
      %p82 = scmp.ne.s32.totalorder %s70, %s71
      %p83 = scmp.eq.s32.totalorder %s19, 1
      %p84 = por %p82, %p83
      %p86 = scmp.ne.s32.totalorder %s71, %s85
      %p87 = scmp.eq.s32.totalorder %s19, 0
      %p88 = por %p86, %p87
      %s90 = sadd.s32 %s89, 1
      %p93 = scmp.eq.s32.totalorder %s13, 1
      %p94 = scmp.ne.s32.totalorder %s89, %s91
      %p95 = scmp.eq.s32.totalorder %s13, 0
      %p96 = por %p94, %p95
      %p97 = scmp.ne.s32.totalorder %s89, %s91
      %p98 = scmp.eq.s32.totalorder %s18, 1
      %p99 = por %p97, %p98
      %p100 = scmp.ne.s32.totalorder %s91, %s92
      %p101 = scmp.eq.s32.totalorder %s18, 0
      %p102 = por %p100, %p101
      %p103 = scmp.ne.s32.totalorder %s91, %s92
      %p104 = scmp.eq.s32.totalorder %s19, 1
      %p105 = por %p103, %p104
      %p107 = scmp.ne.s32.totalorder %s92, %s106
      %p108 = scmp.eq.s32.totalorder %s19, 0
      %p109 = por %p107, %p108
      %s111 = sadd.s32 %s110, 1
      %p114 = scmp.eq.s32.totalorder %s13, 1
      %p115 = scmp.ne.s32.totalorder %s110, %s112
      %p116 = scmp.eq.s32.totalorder %s13, 0
      %p117 = por %p115, %p116
      %p118 = scmp.ne.s32.totalorder %s110, %s112
      %p119 = scmp.eq.s32.totalorder %s18, 1
      %p120 = por %p118, %p119
      %p121 = scmp.ne.s32.totalorder %s112, %s113
      %p122 = scmp.eq.s32.totalorder %s18, 0
      %p123 = por %p121, %p122
      %p124 = scmp.ne.s32.totalorder %s112, %s113
      %p125 = scmp.eq.s32.totalorder %s19, 1
      %p126 = por %p124, %p125
      %p128 = scmp.ne.s32.totalorder %s113, %s127
      %p129 = scmp.eq.s32.totalorder %s19, 0
      %p130 = por %p128, %p129
      %s132 = sadd.s32 %s131, 1
      %p135 = scmp.eq.s32.totalorder %s13, 1
      %p136 = scmp.ne.s32.totalorder %s131, %s133
      %p137 = scmp.eq.s32.totalorder %s13, 0
      %p138 = por %p136, %p137
      %p139 = scmp.ne.s32.totalorder %s131, %s133
      %p140 = scmp.eq.s32.totalorder %s18, 1
      %p141 = por %p139, %p140
      %p142 = scmp.ne.s32.totalorder %s133, %s134
      %p143 = scmp.eq.s32.totalorder %s18, 0
      %p144 = por %p142, %p143
      %p145 = scmp.ne.s32.totalorder %s133, %s134
      %p146 = scmp.eq.s32.totalorder %s19, 1
      %p147 = por %p145, %p146
      %p149 = scmp.ne.s32.totalorder %s134, %s148
      %p150 = scmp.eq.s32.totalorder %s19, 0
      %p151 = por %p149, %p150
      %s152 = ssub.s32 %s13, %s20
      %p153 = scmp.eq.s32.totalorder %s152, 0
      %s155 = sadd.s32 %s154, 1
      %s156 = scalar_select %p153, %s154, %s155
      %p159 = pneg %p153
      %p160 = scmp.eq.s32.totalorder %s13, 1
      %p161 = por %p159, %p160
      %p162 = scmp.ne.s32.totalorder %s154, %s157
      %p163 = scmp.eq.s32.totalorder %s13, 0
      %p164 = por %p162, %p163
      %p165 = scmp.ne.s32.totalorder %s154, %s157
      %p166 = scmp.eq.s32.totalorder %s18, 1
      %p167 = por %p165, %p166
      %p168 = scmp.ne.s32.totalorder %s157, %s158
      %p169 = scmp.eq.s32.totalorder %s18, 0
      %p170 = por %p168, %p169
      %p171 = scmp.ne.s32.totalorder %s157, %s158
      %p172 = scmp.eq.s32.totalorder %s19, 1
      %p173 = por %p171, %p172
      %p175 = scmp.ne.s32.totalorder %s158, %s174
      %p176 = scmp.eq.s32.totalorder %s19, 0
      %p177 = por %p175, %p176
      %p178 = scmp.le.s32.totalorder 1, %s13
      %p179 = scmp.lt.s32.totalorder %s13, 3
      %p180 = pnand %p178, %p179
      %p181 = pneg %p180
      // Predicated region
      $region9: #{scaling_residual_encoder_forward.1} parent=5 // pred_check
        _
      $region10: #{scaling_residual_encoder_forward.1} parent=5 // pred_check_branch
        %183 = sbr.rel (%p180) target = $region12
      $region11: #{scaling_residual_encoder_forward.1} parent=5 // pred_region
        %s184 = ssub.s32 %s13, 1
        // Predicated region
        $region13: #{scaling_residual_encoder_forward.1} parent=11 // pred_check
          %p185 = pneg %p60
        $region14: #{scaling_residual_encoder_forward.1} parent=11 // pred_check_branch
          %187 = sbr.rel (%p185) target = $region16
        $region15: #{scaling_residual_encoder_forward.1} parent=11 // pred_region
          _
        $region16: #{scaling_residual_encoder_forward.1} parent=11 // pred_fallthru
          _
        // Predicated region
        $region17: #{scaling_residual_encoder_forward.1} parent=11 // pred_check
          %p188 = pneg %p81
        $region18: #{scaling_residual_encoder_forward.1} parent=11 // pred_check_branch
          %190 = sbr.rel (%p188) target = $region20
        $region19: #{scaling_residual_encoder_forward.1} parent=11 // pred_region
          _
        $region20: #{scaling_residual_encoder_forward.1} parent=11 // pred_fallthru
          _
        // Predicated region
        $region21: #{scaling_residual_encoder_forward.1} parent=11 // pred_check
          %p191 = pneg %p102
        $region22: #{scaling_residual_encoder_forward.1} parent=11 // pred_check_branch
          %193 = sbr.rel (%p191) target = $region24
        $region23: #{scaling_residual_encoder_forward.1} parent=11 // pred_region
          _
        $region24: #{scaling_residual_encoder_forward.1} parent=11 // pred_fallthru
          _
        // Predicated region
        $region25: #{scaling_residual_encoder_forward.1} parent=11 // pred_check
          %p194 = pneg %p123
        $region26: #{scaling_residual_encoder_forward.1} parent=11 // pred_check_branch
          %196 = sbr.rel (%p194) target = $region28
        $region27: #{scaling_residual_encoder_forward.1} parent=11 // pred_region
          _
        $region28: #{scaling_residual_encoder_forward.1} parent=11 // pred_fallthru
          _
        // Predicated region
        $region29: #{scaling_residual_encoder_forward.1} parent=11 // pred_check
          %p197 = pneg %p144
        $region30: #{scaling_residual_encoder_forward.1} parent=11 // pred_check_branch
          %199 = sbr.rel (%p197) target = $region32
        $region31: #{scaling_residual_encoder_forward.1} parent=11 // pred_region
          %s201 = ssub.s32 16, 16
          %202 = vsyncadd [#allocation4], %s201
          %s204 = sshll.u32 %s5, 4
          %s205 = int_to_ptr.vmem [resolvable:$true] %s204
          %207 = dma.vmem_to_smem %s205, 16, [#allocation3], [#allocation4]
        $region32: #{scaling_residual_encoder_forward.1} parent=11 // pred_fallthru
          _
      $region12: #{scaling_residual_encoder_forward.1} parent=5 // pred_fallthru
        _
      %p208 = scmp.lt.s32.totalorder %s13, 2
      // Predicated region
      $region33: #{scaling_residual_encoder_forward.1} parent=5 // pred_check
        %p209 = pneg %p208
      $region34: #{scaling_residual_encoder_forward.1} parent=5 // pred_check_branch
        %211 = sbr.rel (%p209) target = $region36
      $region35: #{scaling_residual_encoder_forward.1} parent=5 // pred_region
        // Predicated region
        $region37: #{scaling_residual_encoder_forward.1} parent=35 // pred_check
          %p212 = pneg %p33
        $region38: #{scaling_residual_encoder_forward.1} parent=35 // pred_check_branch
          %214 = sbr.rel (%p212) target = $region40
        $region39: #{scaling_residual_encoder_forward.1} parent=35 // pred_region
          %p215 = scmp.lt.s32.totalorder %s13, 1
          %s216 = scalar_select %p215, %s13, 1
          %s217 = smul.addr %s216, 2
          %s218 = smul.addr %s217, 8
          %s219 = scalar_lea.vmem %s0, %s218
        $region40: #{scaling_residual_encoder_forward.1} parent=35 // pred_fallthru
          _
      $region36: #{scaling_residual_encoder_forward.1} parent=5 // pred_fallthru
        _
      %p220 = scmp.le.s32.totalorder 1, %s13
      %p221 = scmp.lt.s32.totalorder %s13, 3
      %p222 = pnand %p220, %p221
      %p223 = pneg %p222
      // Predicated region
      $region41: #{scaling_residual_encoder_forward.1} parent=5 // pred_check
        _
      $region42: #{scaling_residual_encoder_forward.1} parent=5 // pred_check_branch
        %225 = sbr.rel (%p222) target = $region44
      $region43: #{scaling_residual_encoder_forward.1} parent=5 // pred_region
        %s226 = ssub.s32 %s13, 1
        // Predicated region
        $region45: #{scaling_residual_encoder_forward.1} parent=43 // pred_check
          %p227 = pneg %p144
        $region46: #{scaling_residual_encoder_forward.1} parent=43 // pred_check_branch
          %229 = sbr.rel (%p227) target = $region48
        $region47: #{scaling_residual_encoder_forward.1} parent=43 // pred_region
          %230 = dma.done [#allocation4], 16
        $region48: #{scaling_residual_encoder_forward.1} parent=43 // pred_fallthru
          _
        %231 = sfence
        %p232 = scmp.lt.s32.totalorder %s18, 1
        %s233 = scalar_select %p232, %s18, 1
        %s234 = smul.addr %s233, 2
        %s235 = smul.addr %s234, 8
        %s236 = scalar_lea.vmem %s0, %s235
        %p237 = pneg %p39
        %p238 = pneg %p36
        %p239 = pneg %p60
        %p240 = pneg %p57
        %p241 = pneg %p81
        %p242 = pneg %p78
        %p243 = pneg %p102
        %p244 = pneg %p99
        %p245 = pneg %p123
        %p246 = pneg %p120
        %p247 = pneg %p144
        %p248 = pneg %p141
        %p249 = pneg %p170
        %p250 = pneg %p167
        %p251 = scmp.lt.s32.totalorder %s18, 1
        %s252 = scalar_select %p251, %s18, 1
        %s253 = smul.addr %s252, 2
        %s254 = smul.addr %s253, 8
        %s255 = scalar_lea.vmem %s6, %s254
        %p256 = scmp.lt.s32.totalorder %s18, 1
        %s257 = scalar_select %p256, %s18, 1
        %s258 = smul.addr %s257, 2
        %s259 = smul.addr %s258, 8
        %s260 = scalar_lea.vmem %s0, %s259
        %p261 = scmp.lt.s32.totalorder %s18, 1
        %s262 = scalar_select %p261, %s18, 1
        %s263 = smul.addr %s262, 2
        %s264 = smul.addr %s263, 8
        %s265 = scalar_lea.vmem %s6, %s264
        %v266 = vld [vmem:[%s260] sm:$0xff]
        %v267 = vld [vmem:[%s260 + $0x8] sm:$0xff]
        %v268 = vld [vmem:[%s1] sm:$0xff]
        %v269 = vld [vmem:[%s1 + $0x8] sm:$0xff]
        %v270 = vld [vmem:[%s1 + $0x10] sm:$0xff]
        %v271 = vld [vmem:[%s1 + $0x18] sm:$0xff]
        %v272 = vld [vmem:[%s1 + $0x20] sm:$0xff]
        %v273 = vld [vmem:[%s1 + $0x28] sm:$0xff]
        %v274 = vld [vmem:[%s1 + $0x30] sm:$0xff]
        %v275 = vld [vmem:[%s1 + $0x38] sm:$0xff]
        %v276 = vld [vmem:[%s2] sm:$0x1]
        %v278 = vlaneseq
        %v279 = vshrl.u32 %v278, 7
        %v280 = vsub.s32 0, %v279
        %v281 = vrot.slane %v276, %v280
        %vm283 = vcmask 523264
        %v285 = vsel %vm283, %v266, 0
        %v288 = vsel %vm283, %v267, 0
        %290 = vmatprep.subr.mxu0 0.0
        %291 = vmatpush1.msra.mxu0 0.0
        %292 = vmatprep.subr.mxu0 0.0
        %293 = vmatpush1.msra.mxu0 0.0
        %294 = vmatprep.subr.mxu0 0.0
        %295 = vmatpush1.msra.mxu0 0.0
        %296 = vmatprep.subr.mxu0 0.0
        %297 = vmatpush1.msra.mxu0 0.0
        %298 = vmatprep.subr.mxu0 0.0
        %299 = vmatpush1.msra.mxu0 0.0
        %300 = vmatprep.subr.mxu0 0.0
        %301 = vmatpush1.msra.mxu0 0.0
        %302 = vmatprep.subr.mxu0 0.0
        %303 = vmatpush1.msra.mxu0 0.0
        %304 = vmatprep.subr.mxu0 0.0
        %305 = vmatpush1.msra.mxu0 0.0
        %306 = vmatprep.subr.mxu0 0.0
        %307 = vmatpush1.msra.mxu0 %v275
        %308 = vmatprep.subr.mxu0 0.0
        %309 = vmatpush1.msra.mxu0 %v274
        %310 = vmatprep.subr.mxu0 0.0
        %311 = vmatpush1.msra.mxu0 %v273
        %312 = vmatprep.subr.mxu0 0.0
        %313 = vmatpush1.msra.mxu0 %v272
        %314 = vmatprep.subr.mxu0 0.0
        %315 = vmatpush1.msra.mxu0 %v271
        %316 = vmatprep.subr.mxu0 0.0
        %317 = vmatpush1.msra.mxu0 %v270
        %318 = vmatprep.subr.mxu0 0.0
        %319 = vmatpush1.msra.mxu0 %v269
        %320 = vmatprep.subr.mxu0 0.0
        %321 = vmatpush1.msra.mxu0 %v268
        %322 = vmatprep.subr.mxu0 0.0
        %323 = vmatpush2.msra.mxu0 0.0
        %324 = vmatprep.subr.mxu0 0.0
        %325 = vmatpush2.msra.mxu0 0.0
        %326 = vmatprep.subr.mxu0 0.0
        %327 = vmatpush2.msra.mxu0 0.0
        %328 = vmatprep.subr.mxu0 0.0
        %329 = vmatpush2.msra.mxu0 0.0
        %330 = vmatprep.subr.mxu0 0.0
        %331 = vmatpush2.msra.mxu0 0.0
        %332 = vmatprep.subr.mxu0 0.0
        %333 = vmatpush2.msra.mxu0 0.0
        %334 = vmatprep.subr.mxu0 0.0
        %335 = vmatpush2.msra.mxu0 0.0
        %336 = vmatprep.subr.mxu0 0.0
        %337 = vmatpush2.msra.mxu0 0.0
        %338 = vmatprep.subr.mxu0 0.0
        %339 = vmatpush2.msra.mxu0 0.0
        %340 = vmatprep.subr.mxu0 0.0
        %341 = vmatpush2.msra.mxu0 0.0
        %342 = vmatprep.subr.mxu0 0.0
        %343 = vmatpush2.msra.mxu0 0.0
        %344 = vmatprep.subr.mxu0 0.0
        %345 = vmatpush2.msra.mxu0 0.0
        %346 = vmatprep.subr.mxu0 0.0
        %347 = vmatpush2.msra.mxu0 0.0
        %348 = vmatprep.subr.mxu0 0.0
        %349 = vmatpush2.msra.mxu0 0.0
        %350 = vmatprep.subr.mxu0 0.0
        %351 = vmatpush2.msra.mxu0 0.0
        %352 = vmatprep.subr.mxu0 0.0
        %353 = vmatpush2.msra.mxu0 0.0
        %354 = vmatprep.mubr.f32.mxu0 0.0
        %355 = vmatmul.mubr.f32.gmra.mxu0 %v285
        %v356 = vpop.f32.mrf.mxu0
        %v357 = vadd.f32 %v281, %v356
        %v358 = vpop.f32.mrf.mxu0
        %359 = vmatprep.mubr.f32.mxu0 0.0
        %360 = vmatmul.mubr.f32.gmra.mxu0 %v288
        %v361 = vpop.f32.mrf.mxu0
        %v362 = vadd.f32 %v281, %v361
        %v363 = vpop.f32.mrf.mxu0
        %364 = vdwg.mxu0
        %365 = vst [vmem:[#allocation2] sm:$0xff] 0.0
        %366 = vst [vmem:[#allocation2 + $0x8] sm:$0xff] 0.0
        %367 = vst [vmem:[#allocation2 + $0x10] sm:$0x3] 0.0
        %368 = vst [vmem:[#allocation2 + $0x1] sm:$0xff] %v357
        %369 = vst [vmem:[#allocation2 + $0x9] sm:$0xff] %v362
        %s370 = scalar_lea.vmem %s3, 128
        %v371 = vld [vmem:[%s370] sm:$0xff]
        %v372 = vld [vmem:[%s370 + $0x8] sm:$0xff]
        %v373 = vld [vmem:[%s370 + $0x10] sm:$0xff]
        %v374 = vld [vmem:[%s370 + $0x18] sm:$0xff]
        %v375 = vld [vmem:[%s370 + $0x20] sm:$0xff]
        %v376 = vld [vmem:[%s370 + $0x28] sm:$0xff]
        %v377 = vld [vmem:[%s370 + $0x30] sm:$0xff]
        %v378 = vld [vmem:[%s370 + $0x38] sm:$0xff]
        %v379 = vld [vmem:[%s370 + $0x40] sm:$0xff]
        %v380 = vld [vmem:[%s370 + $0x48] sm:$0xff]
        %v381 = vld [vmem:[%s370 + $0x50] sm:$0xff]
        %v382 = vld [vmem:[%s370 + $0x58] sm:$0xff]
        %v383 = vld [vmem:[%s370 + $0x60] sm:$0xff]
        %v384 = vld [vmem:[%s370 + $0x68] sm:$0xff]
        %v385 = vld [vmem:[%s370 + $0x70] sm:$0xff]
        %v386 = vld [vmem:[%s370 + $0x78] sm:$0xff]
        %v387 = vld [vmem:[#allocation2] sm:$0xff]
        %v388 = vld [vmem:[#allocation2 + $0x8] sm:$0xff]
        %v389 = vld [vmem:[%s3] sm:$0xff]
        %v390 = vld [vmem:[%s3 + $0x8] sm:$0xff]
        %v391 = vld [vmem:[%s3 + $0x10] sm:$0xff]
        %v392 = vld [vmem:[%s3 + $0x18] sm:$0xff]
        %v393 = vld [vmem:[%s3 + $0x20] sm:$0xff]
        %v394 = vld [vmem:[%s3 + $0x28] sm:$0xff]
        %v395 = vld [vmem:[%s3 + $0x30] sm:$0xff]
        %v396 = vld [vmem:[%s3 + $0x38] sm:$0xff]
        %v397 = vld [vmem:[%s3 + $0x40] sm:$0xff]
        %v398 = vld [vmem:[%s3 + $0x48] sm:$0xff]
        %v399 = vld [vmem:[%s3 + $0x50] sm:$0xff]
        %v400 = vld [vmem:[%s3 + $0x58] sm:$0xff]
        %v401 = vld [vmem:[%s3 + $0x60] sm:$0xff]
        %v402 = vld [vmem:[%s3 + $0x68] sm:$0xff]
        %v403 = vld [vmem:[%s3 + $0x70] sm:$0xff]
        %v404 = vld [vmem:[%s3 + $0x78] sm:$0xff]
        %405 = vmatprep.subr.mxu0 0.0
        %406 = vmatpush1.msra.mxu0 %v404
        %407 = vmatprep.subr.mxu0 0.0
        %408 = vmatpush1.msra.mxu0 %v403
        %409 = vmatprep.subr.mxu0 0.0
        %410 = vmatpush1.msra.mxu0 %v402
        %411 = vmatprep.subr.mxu0 0.0
        %412 = vmatpush1.msra.mxu0 %v401
        %413 = vmatprep.subr.mxu0 0.0
        %414 = vmatpush1.msra.mxu0 %v400
        %415 = vmatprep.subr.mxu0 0.0
        %416 = vmatpush1.msra.mxu0 %v399
        %417 = vmatprep.subr.mxu0 0.0
        %418 = vmatpush1.msra.mxu0 %v398
        %419 = vmatprep.subr.mxu0 0.0
        %420 = vmatpush1.msra.mxu0 %v397
        %421 = vmatprep.subr.mxu0 0.0
        %422 = vmatpush1.msra.mxu0 %v396
        %423 = vmatprep.subr.mxu0 0.0
        %424 = vmatpush1.msra.mxu0 %v395
        %425 = vmatprep.subr.mxu0 0.0
        %426 = vmatpush1.msra.mxu0 %v394
        %427 = vmatprep.subr.mxu0 0.0
        %428 = vmatpush1.msra.mxu0 %v393
        %429 = vmatprep.subr.mxu0 0.0
        %430 = vmatpush1.msra.mxu0 %v392
        %431 = vmatprep.subr.mxu0 0.0
        %432 = vmatpush1.msra.mxu0 %v391
        %433 = vmatprep.subr.mxu0 0.0
        %434 = vmatpush1.msra.mxu0 %v390
        %435 = vmatprep.subr.mxu0 0.0
        %436 = vmatpush1.msra.mxu0 %v389
        %437 = vmatprep.subr.mxu0 0.0
        %438 = vmatpush2.msra.mxu0 0.0
        %439 = vmatprep.subr.mxu0 0.0
        %440 = vmatpush2.msra.mxu0 0.0
        %441 = vmatprep.subr.mxu0 0.0
        %442 = vmatpush2.msra.mxu0 0.0
        %443 = vmatprep.subr.mxu0 0.0
        %444 = vmatpush2.msra.mxu0 0.0
        %445 = vmatprep.subr.mxu0 0.0
        %446 = vmatpush2.msra.mxu0 0.0
        %447 = vmatprep.subr.mxu0 0.0
        %448 = vmatpush2.msra.mxu0 0.0
        %449 = vmatprep.subr.mxu0 0.0
        %450 = vmatpush2.msra.mxu0 0.0
        %451 = vmatprep.subr.mxu0 0.0
        %452 = vmatpush2.msra.mxu0 0.0
        %453 = vmatprep.subr.mxu0 0.0
        %454 = vmatpush2.msra.mxu0 0.0
        %455 = vmatprep.subr.mxu0 0.0
        %456 = vmatpush2.msra.mxu0 0.0
        %457 = vmatprep.subr.mxu0 0.0
        %458 = vmatpush2.msra.mxu0 0.0
        %459 = vmatprep.subr.mxu0 0.0
        %460 = vmatpush2.msra.mxu0 0.0
        %461 = vmatprep.subr.mxu0 0.0
        %462 = vmatpush2.msra.mxu0 0.0
        %463 = vmatprep.subr.mxu0 0.0
        %464 = vmatpush2.msra.mxu0 0.0
        %465 = vmatprep.subr.mxu0 0.0
        %466 = vmatpush2.msra.mxu0 0.0
        %467 = vmatprep.subr.mxu0 0.0
        %468 = vmatpush2.msra.mxu0 0.0
        %469 = vmatprep.mubr.f32.mxu0 0.0
        %470 = vmatmul.mubr.f32.gmra.mxu0 %v387
        %v471 = vpop.f32.mrf.mxu0
        %v472 = vadd.f32 0.0, %v471
        %v473 = vpop.f32.mrf.mxu0
        %474 = vmatprep.mubr.f32.mxu0 0.0
        %475 = vmatmul.mubr.f32.gmra.mxu0 %v388
        %v476 = vpop.f32.mrf.mxu0
        %v477 = vadd.f32 0.0, %v476
        %v478 = vpop.f32.mrf.mxu0
        %479 = vdwg.mxu0
        %480 = vmatprep.subr.mxu0 0.0
        %481 = vmatpush1.msra.mxu0 %v386
        %482 = vmatprep.subr.mxu0 0.0
        %483 = vmatpush1.msra.mxu0 %v385
        %484 = vmatprep.subr.mxu0 0.0
        %485 = vmatpush1.msra.mxu0 %v384
        %486 = vmatprep.subr.mxu0 0.0
        %487 = vmatpush1.msra.mxu0 %v383
        %488 = vmatprep.subr.mxu0 0.0
        %489 = vmatpush1.msra.mxu0 %v382
        %490 = vmatprep.subr.mxu0 0.0
        %491 = vmatpush1.msra.mxu0 %v381
        %492 = vmatprep.subr.mxu0 0.0
        %493 = vmatpush1.msra.mxu0 %v380
        %494 = vmatprep.subr.mxu0 0.0
        %495 = vmatpush1.msra.mxu0 %v379
        %496 = vmatprep.subr.mxu0 0.0
        %497 = vmatpush1.msra.mxu0 %v378
        %498 = vmatprep.subr.mxu0 0.0
        %499 = vmatpush1.msra.mxu0 %v377
        %500 = vmatprep.subr.mxu0 0.0
        %501 = vmatpush1.msra.mxu0 %v376
        %502 = vmatprep.subr.mxu0 0.0
        %503 = vmatpush1.msra.mxu0 %v375
        %504 = vmatprep.subr.mxu0 0.0
        %505 = vmatpush1.msra.mxu0 %v374
        %506 = vmatprep.subr.mxu0 0.0
        %507 = vmatpush1.msra.mxu0 %v373
        %508 = vmatprep.subr.mxu0 0.0
        %509 = vmatpush1.msra.mxu0 %v372
        %510 = vmatprep.subr.mxu0 0.0
        %511 = vmatpush1.msra.mxu0 %v371
        %512 = vmatprep.subr.mxu0 0.0
        %513 = vmatpush2.msra.mxu0 0.0
        %514 = vmatprep.subr.mxu0 0.0
        %515 = vmatpush2.msra.mxu0 0.0
        %516 = vmatprep.subr.mxu0 0.0
        %517 = vmatpush2.msra.mxu0 0.0
        %518 = vmatprep.subr.mxu0 0.0
        %519 = vmatpush2.msra.mxu0 0.0
        %520 = vmatprep.subr.mxu0 0.0
        %521 = vmatpush2.msra.mxu0 0.0
        %522 = vmatprep.subr.mxu0 0.0
        %523 = vmatpush2.msra.mxu0 0.0
        %524 = vmatprep.subr.mxu0 0.0
        %525 = vmatpush2.msra.mxu0 0.0
        %526 = vmatprep.subr.mxu0 0.0
        %527 = vmatpush2.msra.mxu0 0.0
        %528 = vmatprep.subr.mxu0 0.0
        %529 = vmatpush2.msra.mxu0 0.0
        %530 = vmatprep.subr.mxu0 0.0
        %531 = vmatpush2.msra.mxu0 0.0
        %532 = vmatprep.subr.mxu0 0.0
        %533 = vmatpush2.msra.mxu0 0.0
        %534 = vmatprep.subr.mxu0 0.0
        %535 = vmatpush2.msra.mxu0 0.0
        %536 = vmatprep.subr.mxu0 0.0
        %537 = vmatpush2.msra.mxu0 0.0
        %538 = vmatprep.subr.mxu0 0.0
        %539 = vmatpush2.msra.mxu0 0.0
        %540 = vmatprep.subr.mxu0 0.0
        %541 = vmatpush2.msra.mxu0 0.0
        %542 = vmatprep.subr.mxu0 0.0
        %543 = vmatpush2.msra.mxu0 0.0
        %544 = vmatprep.mubr.f32.mxu0 0.0
        %545 = vmatmul.mubr.f32.gmra.mxu0 %v357
        %v546 = vpop.f32.mrf.mxu0
        %v547 = vadd.f32 %v472, %v546
        %v548 = vpop.f32.mrf.mxu0
        %549 = vmatprep.mubr.f32.mxu0 0.0
        %550 = vmatmul.mubr.f32.gmra.mxu0 %v362
        %v551 = vpop.f32.mrf.mxu0
        %v552 = vadd.f32 %v477, %v551
        %v553 = vpop.f32.mrf.mxu0
        %554 = vdwg.mxu0
        %v555 = vld [vmem:[#allocation2 + $0x2] sm:$0xff]
        %v556 = vld [vmem:[#allocation2 + $0xa] sm:$0xff]
        %s557 = scalar_lea.vmem %s3, 256
        %v558 = vld [vmem:[%s557] sm:$0xff]
        %v559 = vld [vmem:[%s557 + $0x8] sm:$0xff]
        %v560 = vld [vmem:[%s557 + $0x10] sm:$0xff]
        %v561 = vld [vmem:[%s557 + $0x18] sm:$0xff]
        %v562 = vld [vmem:[%s557 + $0x20] sm:$0xff]
        %v563 = vld [vmem:[%s557 + $0x28] sm:$0xff]
        %v564 = vld [vmem:[%s557 + $0x30] sm:$0xff]
        %v565 = vld [vmem:[%s557 + $0x38] sm:$0xff]
        %v566 = vld [vmem:[%s557 + $0x40] sm:$0xff]
        %v567 = vld [vmem:[%s557 + $0x48] sm:$0xff]
        %v568 = vld [vmem:[%s557 + $0x50] sm:$0xff]
        %v569 = vld [vmem:[%s557 + $0x58] sm:$0xff]
        %v570 = vld [vmem:[%s557 + $0x60] sm:$0xff]
        %v571 = vld [vmem:[%s557 + $0x68] sm:$0xff]
        %v572 = vld [vmem:[%s557 + $0x70] sm:$0xff]
        %v573 = vld [vmem:[%s557 + $0x78] sm:$0xff]
        %574 = vmatprep.subr.mxu0 0.0
        %575 = vmatpush1.msra.mxu0 %v573
        %576 = vmatprep.subr.mxu0 0.0
        %577 = vmatpush1.msra.mxu0 %v572
        %578 = vmatprep.subr.mxu0 0.0
        %579 = vmatpush1.msra.mxu0 %v571
        %580 = vmatprep.subr.mxu0 0.0
        %581 = vmatpush1.msra.mxu0 %v570
        %582 = vmatprep.subr.mxu0 0.0
        %583 = vmatpush1.msra.mxu0 %v569
        %584 = vmatprep.subr.mxu0 0.0
        %585 = vmatpush1.msra.mxu0 %v568
        %586 = vmatprep.subr.mxu0 0.0
        %587 = vmatpush1.msra.mxu0 %v567
        %588 = vmatprep.subr.mxu0 0.0
        %589 = vmatpush1.msra.mxu0 %v566
        %590 = vmatprep.subr.mxu0 0.0
        %591 = vmatpush1.msra.mxu0 %v565
        %592 = vmatprep.subr.mxu0 0.0
        %593 = vmatpush1.msra.mxu0 %v564
        %594 = vmatprep.subr.mxu0 0.0
        %595 = vmatpush1.msra.mxu0 %v563
        %596 = vmatprep.subr.mxu0 0.0
        %597 = vmatpush1.msra.mxu0 %v562
        %598 = vmatprep.subr.mxu0 0.0
        %599 = vmatpush1.msra.mxu0 %v561
        %600 = vmatprep.subr.mxu0 0.0
        %601 = vmatpush1.msra.mxu0 %v560
        %602 = vmatprep.subr.mxu0 0.0
        %603 = vmatpush1.msra.mxu0 %v559
        %604 = vmatprep.subr.mxu0 0.0
        %605 = vmatpush1.msra.mxu0 %v558
        %606 = vmatprep.subr.mxu0 0.0
        %607 = vmatpush2.msra.mxu0 0.0
        %608 = vmatprep.subr.mxu0 0.0
        %609 = vmatpush2.msra.mxu0 0.0
        %610 = vmatprep.subr.mxu0 0.0
        %611 = vmatpush2.msra.mxu0 0.0
        %612 = vmatprep.subr.mxu0 0.0
        %613 = vmatpush2.msra.mxu0 0.0
        %614 = vmatprep.subr.mxu0 0.0
        %615 = vmatpush2.msra.mxu0 0.0
        %616 = vmatprep.subr.mxu0 0.0
        %617 = vmatpush2.msra.mxu0 0.0
        %618 = vmatprep.subr.mxu0 0.0
        %619 = vmatpush2.msra.mxu0 0.0
        %620 = vmatprep.subr.mxu0 0.0
        %621 = vmatpush2.msra.mxu0 0.0
        %622 = vmatprep.subr.mxu0 0.0
        %623 = vmatpush2.msra.mxu0 0.0
        %624 = vmatprep.subr.mxu0 0.0
        %625 = vmatpush2.msra.mxu0 0.0
        %626 = vmatprep.subr.mxu0 0.0
        %627 = vmatpush2.msra.mxu0 0.0
        %628 = vmatprep.subr.mxu0 0.0
        %629 = vmatpush2.msra.mxu0 0.0
        %630 = vmatprep.subr.mxu0 0.0
        %631 = vmatpush2.msra.mxu0 0.0
        %632 = vmatprep.subr.mxu0 0.0
        %633 = vmatpush2.msra.mxu0 0.0
        %634 = vmatprep.subr.mxu0 0.0
        %635 = vmatpush2.msra.mxu0 0.0
        %636 = vmatprep.subr.mxu0 0.0
        %637 = vmatpush2.msra.mxu0 0.0
        %638 = vmatprep.mubr.f32.mxu0 0.0
        %639 = vmatmul.mubr.f32.gmra.mxu0 %v555
        %v640 = vpop.f32.mrf.mxu0
        %v641 = vadd.f32 0.0, %v640
        %v642 = vpop.f32.mrf.mxu0
        %643 = vmatprep.mubr.f32.mxu0 0.0
        %644 = vmatmul.mubr.f32.gmra.mxu0 %v556
        %v645 = vpop.f32.mrf.mxu0
        %v646 = vadd.f32 0.0, %v645
        %v647 = vpop.f32.mrf.mxu0
        %648 = vdwg.mxu0
        %v649 = vadd.f32 %v547, %v641
        %v650 = vadd.f32 %v552, %v646
        %v651 = vld [vmem:[%s4] sm:$0x1]
        %v653 = vlaneseq
        %v654 = vshrl.u32 %v653, 7
        %v655 = vsub.s32 0, %v654
        %v656 = vrot.slane %v651, %v655
        %v658 = vadd.f32 %v649, %v656
        %v659 = vadd.f32 %v650, %v656
        %v660 = vmax.f32 %v658, 0.0
        %v661 = vmax.f32 %v659, 0.0
        %662 = vst [vmem:[#allocation2 + $0x1] sm:$0xff] %v660
        %663 = vst [vmem:[#allocation2 + $0x9] sm:$0xff] %v661
        %s664 = scalar_lea.vmem %s3, 512
        %v665 = vld [vmem:[%s664] sm:$0xff]
        %v666 = vld [vmem:[%s664 + $0x8] sm:$0xff]
        %v667 = vld [vmem:[%s664 + $0x10] sm:$0xff]
        %v668 = vld [vmem:[%s664 + $0x18] sm:$0xff]
        %v669 = vld [vmem:[%s664 + $0x20] sm:$0xff]
        %v670 = vld [vmem:[%s664 + $0x28] sm:$0xff]
        %v671 = vld [vmem:[%s664 + $0x30] sm:$0xff]
        %v672 = vld [vmem:[%s664 + $0x38] sm:$0xff]
        %v673 = vld [vmem:[%s664 + $0x40] sm:$0xff]
        %v674 = vld [vmem:[%s664 + $0x48] sm:$0xff]
        %v675 = vld [vmem:[%s664 + $0x50] sm:$0xff]
        %v676 = vld [vmem:[%s664 + $0x58] sm:$0xff]
        %v677 = vld [vmem:[%s664 + $0x60] sm:$0xff]
        %v678 = vld [vmem:[%s664 + $0x68] sm:$0xff]
        %v679 = vld [vmem:[%s664 + $0x70] sm:$0xff]
        %v680 = vld [vmem:[%s664 + $0x78] sm:$0xff]
        %v681 = vld [vmem:[#allocation2] sm:$0xff]
        %v682 = vld [vmem:[#allocation2 + $0x8] sm:$0xff]
        %s683 = scalar_lea.vmem %s3, 384
        %v684 = vld [vmem:[%s683] sm:$0xff]
        %v685 = vld [vmem:[%s683 + $0x8] sm:$0xff]
        %v686 = vld [vmem:[%s683 + $0x10] sm:$0xff]
        %v687 = vld [vmem:[%s683 + $0x18] sm:$0xff]
        %v688 = vld [vmem:[%s683 + $0x20] sm:$0xff]
        %v689 = vld [vmem:[%s683 + $0x28] sm:$0xff]
        %v690 = vld [vmem:[%s683 + $0x30] sm:$0xff]
        %v691 = vld [vmem:[%s683 + $0x38] sm:$0xff]
        %v692 = vld [vmem:[%s683 + $0x40] sm:$0xff]
        %v693 = vld [vmem:[%s683 + $0x48] sm:$0xff]
        %v694 = vld [vmem:[%s683 + $0x50] sm:$0xff]
        %v695 = vld [vmem:[%s683 + $0x58] sm:$0xff]
        %v696 = vld [vmem:[%s683 + $0x60] sm:$0xff]
        %v697 = vld [vmem:[%s683 + $0x68] sm:$0xff]
        %v698 = vld [vmem:[%s683 + $0x70] sm:$0xff]
        %v699 = vld [vmem:[%s683 + $0x78] sm:$0xff]
        %700 = vmatprep.subr.mxu0 0.0
        %701 = vmatpush1.msra.mxu0 %v699
        %702 = vmatprep.subr.mxu0 0.0
        %703 = vmatpush1.msra.mxu0 %v698
        %704 = vmatprep.subr.mxu0 0.0
        %705 = vmatpush1.msra.mxu0 %v697
        %706 = vmatprep.subr.mxu0 0.0
        %707 = vmatpush1.msra.mxu0 %v696
        %708 = vmatprep.subr.mxu0 0.0
        %709 = vmatpush1.msra.mxu0 %v695
        %710 = vmatprep.subr.mxu0 0.0
        %711 = vmatpush1.msra.mxu0 %v694
        %712 = vmatprep.subr.mxu0 0.0
        %713 = vmatpush1.msra.mxu0 %v693
        %714 = vmatprep.subr.mxu0 0.0
        %715 = vmatpush1.msra.mxu0 %v692
        %716 = vmatprep.subr.mxu0 0.0
        %717 = vmatpush1.msra.mxu0 %v691
        %718 = vmatprep.subr.mxu0 0.0
        %719 = vmatpush1.msra.mxu0 %v690
        %720 = vmatprep.subr.mxu0 0.0
        %721 = vmatpush1.msra.mxu0 %v689
        %722 = vmatprep.subr.mxu0 0.0
        %723 = vmatpush1.msra.mxu0 %v688
        %724 = vmatprep.subr.mxu0 0.0
        %725 = vmatpush1.msra.mxu0 %v687
        %726 = vmatprep.subr.mxu0 0.0
        %727 = vmatpush1.msra.mxu0 %v686
        %728 = vmatprep.subr.mxu0 0.0
        %729 = vmatpush1.msra.mxu0 %v685
        %730 = vmatprep.subr.mxu0 0.0
        %731 = vmatpush1.msra.mxu0 %v684
        %732 = vmatprep.subr.mxu0 0.0
        %733 = vmatpush2.msra.mxu0 0.0
        %734 = vmatprep.subr.mxu0 0.0
        %735 = vmatpush2.msra.mxu0 0.0
        %736 = vmatprep.subr.mxu0 0.0
        %737 = vmatpush2.msra.mxu0 0.0
        %738 = vmatprep.subr.mxu0 0.0
        %739 = vmatpush2.msra.mxu0 0.0
        %740 = vmatprep.subr.mxu0 0.0
        %741 = vmatpush2.msra.mxu0 0.0
        %742 = vmatprep.subr.mxu0 0.0
        %743 = vmatpush2.msra.mxu0 0.0
        %744 = vmatprep.subr.mxu0 0.0
        %745 = vmatpush2.msra.mxu0 0.0
        %746 = vmatprep.subr.mxu0 0.0
        %747 = vmatpush2.msra.mxu0 0.0
        %748 = vmatprep.subr.mxu0 0.0
        %749 = vmatpush2.msra.mxu0 0.0
        %750 = vmatprep.subr.mxu0 0.0
        %751 = vmatpush2.msra.mxu0 0.0
        %752 = vmatprep.subr.mxu0 0.0
        %753 = vmatpush2.msra.mxu0 0.0
        %754 = vmatprep.subr.mxu0 0.0
        %755 = vmatpush2.msra.mxu0 0.0
        %756 = vmatprep.subr.mxu0 0.0
        %757 = vmatpush2.msra.mxu0 0.0
        %758 = vmatprep.subr.mxu0 0.0
        %759 = vmatpush2.msra.mxu0 0.0
        %760 = vmatprep.subr.mxu0 0.0
        %761 = vmatpush2.msra.mxu0 0.0
        %762 = vmatprep.subr.mxu0 0.0
        %763 = vmatpush2.msra.mxu0 0.0
        %764 = vmatprep.mubr.f32.mxu0 0.0
        %765 = vmatmul.mubr.f32.gmra.mxu0 %v681
        %v766 = vpop.f32.mrf.mxu0
        %v767 = vadd.f32 0.0, %v766
        %v768 = vpop.f32.mrf.mxu0
        %769 = vmatprep.mubr.f32.mxu0 0.0
        %770 = vmatmul.mubr.f32.gmra.mxu0 %v682
        %v771 = vpop.f32.mrf.mxu0
        %v772 = vadd.f32 0.0, %v771
        %v773 = vpop.f32.mrf.mxu0
        %774 = vdwg.mxu0
        %775 = vmatprep.subr.mxu0 0.0
        %776 = vmatpush1.msra.mxu0 %v680
        %777 = vmatprep.subr.mxu0 0.0
        %778 = vmatpush1.msra.mxu0 %v679
        %779 = vmatprep.subr.mxu0 0.0
        %780 = vmatpush1.msra.mxu0 %v678
        %781 = vmatprep.subr.mxu0 0.0
        %782 = vmatpush1.msra.mxu0 %v677
        %783 = vmatprep.subr.mxu0 0.0
        %784 = vmatpush1.msra.mxu0 %v676
        %785 = vmatprep.subr.mxu0 0.0
        %786 = vmatpush1.msra.mxu0 %v675
        %787 = vmatprep.subr.mxu0 0.0
        %788 = vmatpush1.msra.mxu0 %v674
        %789 = vmatprep.subr.mxu0 0.0
        %790 = vmatpush1.msra.mxu0 %v673
        %791 = vmatprep.subr.mxu0 0.0
        %792 = vmatpush1.msra.mxu0 %v672
        %793 = vmatprep.subr.mxu0 0.0
        %794 = vmatpush1.msra.mxu0 %v671
        %795 = vmatprep.subr.mxu0 0.0
        %796 = vmatpush1.msra.mxu0 %v670
        %797 = vmatprep.subr.mxu0 0.0
        %798 = vmatpush1.msra.mxu0 %v669
        %799 = vmatprep.subr.mxu0 0.0
        %800 = vmatpush1.msra.mxu0 %v668
        %801 = vmatprep.subr.mxu0 0.0
        %802 = vmatpush1.msra.mxu0 %v667
        %803 = vmatprep.subr.mxu0 0.0
        %804 = vmatpush1.msra.mxu0 %v666
        %805 = vmatprep.subr.mxu0 0.0
        %806 = vmatpush1.msra.mxu0 %v665
        %807 = vmatprep.subr.mxu0 0.0
        %808 = vmatpush2.msra.mxu0 0.0
        %809 = vmatprep.subr.mxu0 0.0
        %810 = vmatpush2.msra.mxu0 0.0
        %811 = vmatprep.subr.mxu0 0.0
        %812 = vmatpush2.msra.mxu0 0.0
        %813 = vmatprep.subr.mxu0 0.0
        %814 = vmatpush2.msra.mxu0 0.0
        %815 = vmatprep.subr.mxu0 0.0
        %816 = vmatpush2.msra.mxu0 0.0
        %817 = vmatprep.subr.mxu0 0.0
        %818 = vmatpush2.msra.mxu0 0.0
        %819 = vmatprep.subr.mxu0 0.0
        %820 = vmatpush2.msra.mxu0 0.0
        %821 = vmatprep.subr.mxu0 0.0
        %822 = vmatpush2.msra.mxu0 0.0
        %823 = vmatprep.subr.mxu0 0.0
        %824 = vmatpush2.msra.mxu0 0.0
        %825 = vmatprep.subr.mxu0 0.0
        %826 = vmatpush2.msra.mxu0 0.0
        %827 = vmatprep.subr.mxu0 0.0
        %828 = vmatpush2.msra.mxu0 0.0
        %829 = vmatprep.subr.mxu0 0.0
        %830 = vmatpush2.msra.mxu0 0.0
        %831 = vmatprep.subr.mxu0 0.0
        %832 = vmatpush2.msra.mxu0 0.0
        %833 = vmatprep.subr.mxu0 0.0
        %834 = vmatpush2.msra.mxu0 0.0
        %835 = vmatprep.subr.mxu0 0.0
        %836 = vmatpush2.msra.mxu0 0.0
        %837 = vmatprep.subr.mxu0 0.0
        %838 = vmatpush2.msra.mxu0 0.0
        %839 = vmatprep.mubr.f32.mxu0 0.0
        %840 = vmatmul.mubr.f32.gmra.mxu0 %v660
        %v841 = vpop.f32.mrf.mxu0
        %v842 = vadd.f32 %v767, %v841
        %v843 = vpop.f32.mrf.mxu0
        %844 = vmatprep.mubr.f32.mxu0 0.0
        %845 = vmatmul.mubr.f32.gmra.mxu0 %v661
        %v846 = vpop.f32.mrf.mxu0
        %v847 = vadd.f32 %v772, %v846
        %v848 = vpop.f32.mrf.mxu0
        %849 = vdwg.mxu0
        %v850 = vld [vmem:[#allocation2 + $0x2] sm:$0xff]
        %v851 = vld [vmem:[#allocation2 + $0xa] sm:$0xff]
        %s852 = scalar_lea.vmem %s3, 640
        %v853 = vld [vmem:[%s852] sm:$0xff]
        %v854 = vld [vmem:[%s852 + $0x8] sm:$0xff]
        %v855 = vld [vmem:[%s852 + $0x10] sm:$0xff]
        %v856 = vld [vmem:[%s852 + $0x18] sm:$0xff]
        %v857 = vld [vmem:[%s852 + $0x20] sm:$0xff]
        %v858 = vld [vmem:[%s852 + $0x28] sm:$0xff]
        %v859 = vld [vmem:[%s852 + $0x30] sm:$0xff]
        %v860 = vld [vmem:[%s852 + $0x38] sm:$0xff]
        %v861 = vld [vmem:[%s852 + $0x40] sm:$0xff]
        %v862 = vld [vmem:[%s852 + $0x48] sm:$0xff]
        %v863 = vld [vmem:[%s852 + $0x50] sm:$0xff]
        %v864 = vld [vmem:[%s852 + $0x58] sm:$0xff]
        %v865 = vld [vmem:[%s852 + $0x60] sm:$0xff]
        %v866 = vld [vmem:[%s852 + $0x68] sm:$0xff]
        %v867 = vld [vmem:[%s852 + $0x70] sm:$0xff]
        %v868 = vld [vmem:[%s852 + $0x78] sm:$0xff]
        %869 = vmatprep.subr.mxu0 0.0
        %870 = vmatpush1.msra.mxu0 %v868
        %871 = vmatprep.subr.mxu0 0.0
        %872 = vmatpush1.msra.mxu0 %v867
        %873 = vmatprep.subr.mxu0 0.0
        %874 = vmatpush1.msra.mxu0 %v866
        %875 = vmatprep.subr.mxu0 0.0
        %876 = vmatpush1.msra.mxu0 %v865
        %877 = vmatprep.subr.mxu0 0.0
        %878 = vmatpush1.msra.mxu0 %v864
        %879 = vmatprep.subr.mxu0 0.0
        %880 = vmatpush1.msra.mxu0 %v863
        %881 = vmatprep.subr.mxu0 0.0
        %882 = vmatpush1.msra.mxu0 %v862
        %883 = vmatprep.subr.mxu0 0.0
        %884 = vmatpush1.msra.mxu0 %v861
        %885 = vmatprep.subr.mxu0 0.0
        %886 = vmatpush1.msra.mxu0 %v860
        %887 = vmatprep.subr.mxu0 0.0
        %888 = vmatpush1.msra.mxu0 %v859
        %889 = vmatprep.subr.mxu0 0.0
        %890 = vmatpush1.msra.mxu0 %v858
        %891 = vmatprep.subr.mxu0 0.0
        %892 = vmatpush1.msra.mxu0 %v857
        %893 = vmatprep.subr.mxu0 0.0
        %894 = vmatpush1.msra.mxu0 %v856
        %895 = vmatprep.subr.mxu0 0.0
        %896 = vmatpush1.msra.mxu0 %v855
        %897 = vmatprep.subr.mxu0 0.0
        %898 = vmatpush1.msra.mxu0 %v854
        %899 = vmatprep.subr.mxu0 0.0
        %900 = vmatpush1.msra.mxu0 %v853
        %901 = vmatprep.subr.mxu0 0.0
        %902 = vmatpush2.msra.mxu0 0.0
        %903 = vmatprep.subr.mxu0 0.0
        %904 = vmatpush2.msra.mxu0 0.0
        %905 = vmatprep.subr.mxu0 0.0
        %906 = vmatpush2.msra.mxu0 0.0
        %907 = vmatprep.subr.mxu0 0.0
        %908 = vmatpush2.msra.mxu0 0.0
        %909 = vmatprep.subr.mxu0 0.0
        %910 = vmatpush2.msra.mxu0 0.0
        %911 = vmatprep.subr.mxu0 0.0
        %912 = vmatpush2.msra.mxu0 0.0
        %913 = vmatprep.subr.mxu0 0.0
        %914 = vmatpush2.msra.mxu0 0.0
        %915 = vmatprep.subr.mxu0 0.0
        %916 = vmatpush2.msra.mxu0 0.0
        %917 = vmatprep.subr.mxu0 0.0
        %918 = vmatpush2.msra.mxu0 0.0
        %919 = vmatprep.subr.mxu0 0.0
        %920 = vmatpush2.msra.mxu0 0.0
        %921 = vmatprep.subr.mxu0 0.0
        %922 = vmatpush2.msra.mxu0 0.0
        %923 = vmatprep.subr.mxu0 0.0
        %924 = vmatpush2.msra.mxu0 0.0
        %925 = vmatprep.subr.mxu0 0.0
        %926 = vmatpush2.msra.mxu0 0.0
        %927 = vmatprep.subr.mxu0 0.0
        %928 = vmatpush2.msra.mxu0 0.0
        %929 = vmatprep.subr.mxu0 0.0
        %930 = vmatpush2.msra.mxu0 0.0
        %931 = vmatprep.subr.mxu0 0.0
        %932 = vmatpush2.msra.mxu0 0.0
        %933 = vmatprep.mubr.f32.mxu0 0.0
        %934 = vmatmul.mubr.f32.gmra.mxu0 %v850
        %v935 = vpop.f32.mrf.mxu0
        %v936 = vadd.f32 0.0, %v935
        %v937 = vpop.f32.mrf.mxu0
        %938 = vmatprep.mubr.f32.mxu0 0.0
        %939 = vmatmul.mubr.f32.gmra.mxu0 %v851
        %v940 = vpop.f32.mrf.mxu0
        %v941 = vadd.f32 0.0, %v940
        %v942 = vpop.f32.mrf.mxu0
        %943 = vdwg.mxu0
        %v944 = vadd.f32 %v842, %v936
        %v945 = vadd.f32 %v847, %v941
        %s946 = scalar_lea.vmem %s4, 1
        %v947 = vld [vmem:[%s946] sm:$0x1]
        %v949 = vlaneseq
        %v950 = vshrl.u32 %v949, 7
        %v951 = vsub.s32 0, %v950
        %v952 = vrot.slane %v947, %v951
        %v954 = vadd.f32 %v944, %v952
        %v955 = vadd.f32 %v945, %v952
        %s956 = sld [smem:[#allocation3]]
        %v957 = vstv %s956
        %v958 = vmul.f32 %v957, %v954
        %v959 = vmul.f32 %v957, %v955
        %v960 = vadd.f32 %v357, %v958
        %v961 = vadd.f32 %v362, %v959
        %962 = vst [vmem:[#allocation2 + $0x1] sm:$0xff] %v960
        %963 = vst [vmem:[#allocation2 + $0x9] sm:$0xff] %v961
        %s964 = scalar_lea.vmem %s3, 896
        %v965 = vld [vmem:[%s964] sm:$0xff]
        %v966 = vld [vmem:[%s964 + $0x8] sm:$0xff]
        %v967 = vld [vmem:[%s964 + $0x10] sm:$0xff]
        %v968 = vld [vmem:[%s964 + $0x18] sm:$0xff]
        %v969 = vld [vmem:[%s964 + $0x20] sm:$0xff]
        %v970 = vld [vmem:[%s964 + $0x28] sm:$0xff]
        %v971 = vld [vmem:[%s964 + $0x30] sm:$0xff]
        %v972 = vld [vmem:[%s964 + $0x38] sm:$0xff]
        %v973 = vld [vmem:[%s964 + $0x40] sm:$0xff]
        %v974 = vld [vmem:[%s964 + $0x48] sm:$0xff]
        %v975 = vld [vmem:[%s964 + $0x50] sm:$0xff]
        %v976 = vld [vmem:[%s964 + $0x58] sm:$0xff]
        %v977 = vld [vmem:[%s964 + $0x60] sm:$0xff]
        %v978 = vld [vmem:[%s964 + $0x68] sm:$0xff]
        %v979 = vld [vmem:[%s964 + $0x70] sm:$0xff]
        %v980 = vld [vmem:[%s964 + $0x78] sm:$0xff]
        %v981 = vld [vmem:[#allocation2] sm:$0xff]
        %v982 = vld [vmem:[#allocation2 + $0x8] sm:$0xff]
        %s983 = scalar_lea.vmem %s3, 768
        %v984 = vld [vmem:[%s983] sm:$0xff]
        %v985 = vld [vmem:[%s983 + $0x8] sm:$0xff]
        %v986 = vld [vmem:[%s983 + $0x10] sm:$0xff]
        %v987 = vld [vmem:[%s983 + $0x18] sm:$0xff]
        %v988 = vld [vmem:[%s983 + $0x20] sm:$0xff]
        %v989 = vld [vmem:[%s983 + $0x28] sm:$0xff]
        %v990 = vld [vmem:[%s983 + $0x30] sm:$0xff]
        %v991 = vld [vmem:[%s983 + $0x38] sm:$0xff]
        %v992 = vld [vmem:[%s983 + $0x40] sm:$0xff]
        %v993 = vld [vmem:[%s983 + $0x48] sm:$0xff]
        %v994 = vld [vmem:[%s983 + $0x50] sm:$0xff]
        %v995 = vld [vmem:[%s983 + $0x58] sm:$0xff]
        %v996 = vld [vmem:[%s983 + $0x60] sm:$0xff]
        %v997 = vld [vmem:[%s983 + $0x68] sm:$0xff]
        %v998 = vld [vmem:[%s983 + $0x70] sm:$0xff]
        %v999 = vld [vmem:[%s983 + $0x78] sm:$0xff]
        %1000 = vmatprep.subr.mxu0 0.0
        %1001 = vmatpush1.msra.mxu0 %v999
        %1002 = vmatprep.subr.mxu0 0.0
        %1003 = vmatpush1.msra.mxu0 %v998
        %1004 = vmatprep.subr.mxu0 0.0
        %1005 = vmatpush1.msra.mxu0 %v997
        %1006 = vmatprep.subr.mxu0 0.0
        %1007 = vmatpush1.msra.mxu0 %v996
        %1008 = vmatprep.subr.mxu0 0.0
        %1009 = vmatpush1.msra.mxu0 %v995
        %1010 = vmatprep.subr.mxu0 0.0
        %1011 = vmatpush1.msra.mxu0 %v994
        %1012 = vmatprep.subr.mxu0 0.0
        %1013 = vmatpush1.msra.mxu0 %v993
        %1014 = vmatprep.subr.mxu0 0.0
        %1015 = vmatpush1.msra.mxu0 %v992
        %1016 = vmatprep.subr.mxu0 0.0
        %1017 = vmatpush1.msra.mxu0 %v991
        %1018 = vmatprep.subr.mxu0 0.0
        %1019 = vmatpush1.msra.mxu0 %v990
        %1020 = vmatprep.subr.mxu0 0.0
        %1021 = vmatpush1.msra.mxu0 %v989
        %1022 = vmatprep.subr.mxu0 0.0
        %1023 = vmatpush1.msra.mxu0 %v988
        %1024 = vmatprep.subr.mxu0 0.0
        %1025 = vmatpush1.msra.mxu0 %v987
        %1026 = vmatprep.subr.mxu0 0.0
        %1027 = vmatpush1.msra.mxu0 %v986
        %1028 = vmatprep.subr.mxu0 0.0
        %1029 = vmatpush1.msra.mxu0 %v985
        %1030 = vmatprep.subr.mxu0 0.0
        %1031 = vmatpush1.msra.mxu0 %v984
        %1032 = vmatprep.subr.mxu0 0.0
        %1033 = vmatpush2.msra.mxu0 0.0
        %1034 = vmatprep.subr.mxu0 0.0
        %1035 = vmatpush2.msra.mxu0 0.0
        %1036 = vmatprep.subr.mxu0 0.0
        %1037 = vmatpush2.msra.mxu0 0.0
        %1038 = vmatprep.subr.mxu0 0.0
        %1039 = vmatpush2.msra.mxu0 0.0
        %1040 = vmatprep.subr.mxu0 0.0
        %1041 = vmatpush2.msra.mxu0 0.0
        %1042 = vmatprep.subr.mxu0 0.0
        %1043 = vmatpush2.msra.mxu0 0.0
        %1044 = vmatprep.subr.mxu0 0.0
        %1045 = vmatpush2.msra.mxu0 0.0
        %1046 = vmatprep.subr.mxu0 0.0
        %1047 = vmatpush2.msra.mxu0 0.0
        %1048 = vmatprep.subr.mxu0 0.0
        %1049 = vmatpush2.msra.mxu0 0.0
        %1050 = vmatprep.subr.mxu0 0.0
        %1051 = vmatpush2.msra.mxu0 0.0
        %1052 = vmatprep.subr.mxu0 0.0
        %1053 = vmatpush2.msra.mxu0 0.0
        %1054 = vmatprep.subr.mxu0 0.0
        %1055 = vmatpush2.msra.mxu0 0.0
        %1056 = vmatprep.subr.mxu0 0.0
        %1057 = vmatpush2.msra.mxu0 0.0
        %1058 = vmatprep.subr.mxu0 0.0
        %1059 = vmatpush2.msra.mxu0 0.0
        %1060 = vmatprep.subr.mxu0 0.0
        %1061 = vmatpush2.msra.mxu0 0.0
        %1062 = vmatprep.subr.mxu0 0.0
        %1063 = vmatpush2.msra.mxu0 0.0
        %1064 = vmatprep.mubr.f32.mxu0 0.0
        %1065 = vmatmul.mubr.f32.gmra.mxu0 %v981
        %v1066 = vpop.f32.mrf.mxu0
        %v1067 = vadd.f32 0.0, %v1066
        %v1068 = vpop.f32.mrf.mxu0
        %1069 = vmatprep.mubr.f32.mxu0 0.0
        %1070 = vmatmul.mubr.f32.gmra.mxu0 %v982
        %v1071 = vpop.f32.mrf.mxu0
        %v1072 = vadd.f32 0.0, %v1071
        %v1073 = vpop.f32.mrf.mxu0
        %1074 = vdwg.mxu0
        %1075 = vmatprep.subr.mxu0 0.0
        %1076 = vmatpush1.msra.mxu0 %v980
        %1077 = vmatprep.subr.mxu0 0.0
        %1078 = vmatpush1.msra.mxu0 %v979
        %1079 = vmatprep.subr.mxu0 0.0
        %1080 = vmatpush1.msra.mxu0 %v978
        %1081 = vmatprep.subr.mxu0 0.0
        %1082 = vmatpush1.msra.mxu0 %v977
        %1083 = vmatprep.subr.mxu0 0.0
        %1084 = vmatpush1.msra.mxu0 %v976
        %1085 = vmatprep.subr.mxu0 0.0
        %1086 = vmatpush1.msra.mxu0 %v975
        %1087 = vmatprep.subr.mxu0 0.0
        %1088 = vmatpush1.msra.mxu0 %v974
        %1089 = vmatprep.subr.mxu0 0.0
        %1090 = vmatpush1.msra.mxu0 %v973
        %1091 = vmatprep.subr.mxu0 0.0
        %1092 = vmatpush1.msra.mxu0 %v972
        %1093 = vmatprep.subr.mxu0 0.0
        %1094 = vmatpush1.msra.mxu0 %v971
        %1095 = vmatprep.subr.mxu0 0.0
        %1096 = vmatpush1.msra.mxu0 %v970
        %1097 = vmatprep.subr.mxu0 0.0
        %1098 = vmatpush1.msra.mxu0 %v969
        %1099 = vmatprep.subr.mxu0 0.0
        %1100 = vmatpush1.msra.mxu0 %v968
        %1101 = vmatprep.subr.mxu0 0.0
        %1102 = vmatpush1.msra.mxu0 %v967
        %1103 = vmatprep.subr.mxu0 0.0
        %1104 = vmatpush1.msra.mxu0 %v966
        %1105 = vmatprep.subr.mxu0 0.0
        %1106 = vmatpush1.msra.mxu0 %v965
        %1107 = vmatprep.subr.mxu0 0.0
        %1108 = vmatpush2.msra.mxu0 0.0
        %1109 = vmatprep.subr.mxu0 0.0
        %1110 = vmatpush2.msra.mxu0 0.0
        %1111 = vmatprep.subr.mxu0 0.0
        %1112 = vmatpush2.msra.mxu0 0.0
        %1113 = vmatprep.subr.mxu0 0.0
        %1114 = vmatpush2.msra.mxu0 0.0
        %1115 = vmatprep.subr.mxu0 0.0
        %1116 = vmatpush2.msra.mxu0 0.0
        %1117 = vmatprep.subr.mxu0 0.0
        %1118 = vmatpush2.msra.mxu0 0.0
        %1119 = vmatprep.subr.mxu0 0.0
        %1120 = vmatpush2.msra.mxu0 0.0
        %1121 = vmatprep.subr.mxu0 0.0
        %1122 = vmatpush2.msra.mxu0 0.0
        %1123 = vmatprep.subr.mxu0 0.0
        %1124 = vmatpush2.msra.mxu0 0.0
        %1125 = vmatprep.subr.mxu0 0.0
        %1126 = vmatpush2.msra.mxu0 0.0
        %1127 = vmatprep.subr.mxu0 0.0
        %1128 = vmatpush2.msra.mxu0 0.0
        %1129 = vmatprep.subr.mxu0 0.0
        %1130 = vmatpush2.msra.mxu0 0.0
        %1131 = vmatprep.subr.mxu0 0.0
        %1132 = vmatpush2.msra.mxu0 0.0
        %1133 = vmatprep.subr.mxu0 0.0
        %1134 = vmatpush2.msra.mxu0 0.0
        %1135 = vmatprep.subr.mxu0 0.0
        %1136 = vmatpush2.msra.mxu0 0.0
        %1137 = vmatprep.subr.mxu0 0.0
        %1138 = vmatpush2.msra.mxu0 0.0
        %1139 = vmatprep.mubr.f32.mxu0 0.0
        %1140 = vmatmul.mubr.f32.gmra.mxu0 %v960
        %v1141 = vpop.f32.mrf.mxu0
        %v1142 = vadd.f32 %v1067, %v1141
        %v1143 = vpop.f32.mrf.mxu0
        %1144 = vmatprep.mubr.f32.mxu0 0.0
        %1145 = vmatmul.mubr.f32.gmra.mxu0 %v961
        %v1146 = vpop.f32.mrf.mxu0
        %v1147 = vadd.f32 %v1072, %v1146
        %v1148 = vpop.f32.mrf.mxu0
        %1149 = vdwg.mxu0
        %v1150 = vld [vmem:[#allocation2 + $0x2] sm:$0xff]
        %v1151 = vld [vmem:[#allocation2 + $0xa] sm:$0xff]
        %s1152 = scalar_lea.vmem %s3, 1024
        %v1153 = vld [vmem:[%s1152] sm:$0xff]
        %v1154 = vld [vmem:[%s1152 + $0x8] sm:$0xff]
        %v1155 = vld [vmem:[%s1152 + $0x10] sm:$0xff]
        %v1156 = vld [vmem:[%s1152 + $0x18] sm:$0xff]
        %v1157 = vld [vmem:[%s1152 + $0x20] sm:$0xff]
        %v1158 = vld [vmem:[%s1152 + $0x28] sm:$0xff]
        %v1159 = vld [vmem:[%s1152 + $0x30] sm:$0xff]
        %v1160 = vld [vmem:[%s1152 + $0x38] sm:$0xff]
        %v1161 = vld [vmem:[%s1152 + $0x40] sm:$0xff]
        %v1162 = vld [vmem:[%s1152 + $0x48] sm:$0xff]
        %v1163 = vld [vmem:[%s1152 + $0x50] sm:$0xff]
        %v1164 = vld [vmem:[%s1152 + $0x58] sm:$0xff]
        %v1165 = vld [vmem:[%s1152 + $0x60] sm:$0xff]
        %v1166 = vld [vmem:[%s1152 + $0x68] sm:$0xff]
        %v1167 = vld [vmem:[%s1152 + $0x70] sm:$0xff]
        %v1168 = vld [vmem:[%s1152 + $0x78] sm:$0xff]
        %1169 = vmatprep.subr.mxu0 0.0
        %1170 = vmatpush1.msra.mxu0 %v1168
        %1171 = vmatprep.subr.mxu0 0.0
        %1172 = vmatpush1.msra.mxu0 %v1167
        %1173 = vmatprep.subr.mxu0 0.0
        %1174 = vmatpush1.msra.mxu0 %v1166
        %1175 = vmatprep.subr.mxu0 0.0
        %1176 = vmatpush1.msra.mxu0 %v1165
        %1177 = vmatprep.subr.mxu0 0.0
        %1178 = vmatpush1.msra.mxu0 %v1164
        %1179 = vmatprep.subr.mxu0 0.0
        %1180 = vmatpush1.msra.mxu0 %v1163
        %1181 = vmatprep.subr.mxu0 0.0
        %1182 = vmatpush1.msra.mxu0 %v1162
        %1183 = vmatprep.subr.mxu0 0.0
        %1184 = vmatpush1.msra.mxu0 %v1161
        %1185 = vmatprep.subr.mxu0 0.0
        %1186 = vmatpush1.msra.mxu0 %v1160
        %1187 = vmatprep.subr.mxu0 0.0
        %1188 = vmatpush1.msra.mxu0 %v1159
        %1189 = vmatprep.subr.mxu0 0.0
        %1190 = vmatpush1.msra.mxu0 %v1158
        %1191 = vmatprep.subr.mxu0 0.0
        %1192 = vmatpush1.msra.mxu0 %v1157
        %1193 = vmatprep.subr.mxu0 0.0
        %1194 = vmatpush1.msra.mxu0 %v1156
        %1195 = vmatprep.subr.mxu0 0.0
        %1196 = vmatpush1.msra.mxu0 %v1155
        %1197 = vmatprep.subr.mxu0 0.0
        %1198 = vmatpush1.msra.mxu0 %v1154
        %1199 = vmatprep.subr.mxu0 0.0
        %1200 = vmatpush1.msra.mxu0 %v1153
        %1201 = vmatprep.subr.mxu0 0.0
        %1202 = vmatpush2.msra.mxu0 0.0
        %1203 = vmatprep.subr.mxu0 0.0
        %1204 = vmatpush2.msra.mxu0 0.0
        %1205 = vmatprep.subr.mxu0 0.0
        %1206 = vmatpush2.msra.mxu0 0.0
        %1207 = vmatprep.subr.mxu0 0.0
        %1208 = vmatpush2.msra.mxu0 0.0
        %1209 = vmatprep.subr.mxu0 0.0
        %1210 = vmatpush2.msra.mxu0 0.0
        %1211 = vmatprep.subr.mxu0 0.0
        %1212 = vmatpush2.msra.mxu0 0.0
        %1213 = vmatprep.subr.mxu0 0.0
        %1214 = vmatpush2.msra.mxu0 0.0
        %1215 = vmatprep.subr.mxu0 0.0
        %1216 = vmatpush2.msra.mxu0 0.0
        %1217 = vmatprep.subr.mxu0 0.0
        %1218 = vmatpush2.msra.mxu0 0.0
        %1219 = vmatprep.subr.mxu0 0.0
        %1220 = vmatpush2.msra.mxu0 0.0
        %1221 = vmatprep.subr.mxu0 0.0
        %1222 = vmatpush2.msra.mxu0 0.0
        %1223 = vmatprep.subr.mxu0 0.0
        %1224 = vmatpush2.msra.mxu0 0.0
        %1225 = vmatprep.subr.mxu0 0.0
        %1226 = vmatpush2.msra.mxu0 0.0
        %1227 = vmatprep.subr.mxu0 0.0
        %1228 = vmatpush2.msra.mxu0 0.0
        %1229 = vmatprep.subr.mxu0 0.0
        %1230 = vmatpush2.msra.mxu0 0.0
        %1231 = vmatprep.subr.mxu0 0.0
        %1232 = vmatpush2.msra.mxu0 0.0
        %1233 = vmatprep.mubr.f32.mxu0 0.0
        %1234 = vmatmul.mubr.f32.gmra.mxu0 %v1150
        %v1235 = vpop.f32.mrf.mxu0
        %v1236 = vadd.f32 0.0, %v1235
        %v1237 = vpop.f32.mrf.mxu0
        %1238 = vmatprep.mubr.f32.mxu0 0.0
        %1239 = vmatmul.mubr.f32.gmra.mxu0 %v1151
        %v1240 = vpop.f32.mrf.mxu0
        %v1241 = vadd.f32 0.0, %v1240
        %v1242 = vpop.f32.mrf.mxu0
        %1243 = vdwg.mxu0
        %v1244 = vadd.f32 %v1142, %v1236
        %v1245 = vadd.f32 %v1147, %v1241
        %s1246 = scalar_lea.vmem %s4, 2
        %v1247 = vld [vmem:[%s1246] sm:$0x1]
        %v1249 = vlaneseq
        %v1250 = vshrl.u32 %v1249, 7
        %v1251 = vsub.s32 0, %v1250
        %v1252 = vrot.slane %v1247, %v1251
        %v1254 = vadd.f32 %v1244, %v1252
        %v1255 = vadd.f32 %v1245, %v1252
        %v1256 = vmax.f32 %v1254, 0.0
        %v1257 = vmax.f32 %v1255, 0.0
        %1258 = vst [vmem:[#allocation2 + $0x1] sm:$0xff] %v1256
        %1259 = vst [vmem:[#allocation2 + $0x9] sm:$0xff] %v1257
        %s1260 = scalar_lea.vmem %s3, 1280
        %v1261 = vld [vmem:[%s1260] sm:$0xff]
        %v1262 = vld [vmem:[%s1260 + $0x8] sm:$0xff]
        %v1263 = vld [vmem:[%s1260 + $0x10] sm:$0xff]
        %v1264 = vld [vmem:[%s1260 + $0x18] sm:$0xff]
        %v1265 = vld [vmem:[%s1260 + $0x20] sm:$0xff]
        %v1266 = vld [vmem:[%s1260 + $0x28] sm:$0xff]
        %v1267 = vld [vmem:[%s1260 + $0x30] sm:$0xff]
        %v1268 = vld [vmem:[%s1260 + $0x38] sm:$0xff]
        %v1269 = vld [vmem:[%s1260 + $0x40] sm:$0xff]
        %v1270 = vld [vmem:[%s1260 + $0x48] sm:$0xff]
        %v1271 = vld [vmem:[%s1260 + $0x50] sm:$0xff]
        %v1272 = vld [vmem:[%s1260 + $0x58] sm:$0xff]
        %v1273 = vld [vmem:[%s1260 + $0x60] sm:$0xff]
        %v1274 = vld [vmem:[%s1260 + $0x68] sm:$0xff]
        %v1275 = vld [vmem:[%s1260 + $0x70] sm:$0xff]
        %v1276 = vld [vmem:[%s1260 + $0x78] sm:$0xff]
        %v1277 = vld [vmem:[#allocation2] sm:$0xff]
        %v1278 = vld [vmem:[#allocation2 + $0x8] sm:$0xff]
        %s1279 = scalar_lea.vmem %s3, 1152
        %v1280 = vld [vmem:[%s1279] sm:$0xff]
        %v1281 = vld [vmem:[%s1279 + $0x8] sm:$0xff]
        %v1282 = vld [vmem:[%s1279 + $0x10] sm:$0xff]
        %v1283 = vld [vmem:[%s1279 + $0x18] sm:$0xff]
        %v1284 = vld [vmem:[%s1279 + $0x20] sm:$0xff]
        %v1285 = vld [vmem:[%s1279 + $0x28] sm:$0xff]
        %v1286 = vld [vmem:[%s1279 + $0x30] sm:$0xff]
        %v1287 = vld [vmem:[%s1279 + $0x38] sm:$0xff]
        %v1288 = vld [vmem:[%s1279 + $0x40] sm:$0xff]
        %v1289 = vld [vmem:[%s1279 + $0x48] sm:$0xff]
        %v1290 = vld [vmem:[%s1279 + $0x50] sm:$0xff]
        %v1291 = vld [vmem:[%s1279 + $0x58] sm:$0xff]
        %v1292 = vld [vmem:[%s1279 + $0x60] sm:$0xff]
        %v1293 = vld [vmem:[%s1279 + $0x68] sm:$0xff]
        %v1294 = vld [vmem:[%s1279 + $0x70] sm:$0xff]
        %v1295 = vld [vmem:[%s1279 + $0x78] sm:$0xff]
        %1296 = vmatprep.subr.mxu0 0.0
        %1297 = vmatpush1.msra.mxu0 %v1295
        %1298 = vmatprep.subr.mxu0 0.0
        %1299 = vmatpush1.msra.mxu0 %v1294
        %1300 = vmatprep.subr.mxu0 0.0
        %1301 = vmatpush1.msra.mxu0 %v1293
        %1302 = vmatprep.subr.mxu0 0.0
        %1303 = vmatpush1.msra.mxu0 %v1292
        %1304 = vmatprep.subr.mxu0 0.0
        %1305 = vmatpush1.msra.mxu0 %v1291
        %1306 = vmatprep.subr.mxu0 0.0
        %1307 = vmatpush1.msra.mxu0 %v1290
        %1308 = vmatprep.subr.mxu0 0.0
        %1309 = vmatpush1.msra.mxu0 %v1289
        %1310 = vmatprep.subr.mxu0 0.0
        %1311 = vmatpush1.msra.mxu0 %v1288
        %1312 = vmatprep.subr.mxu0 0.0
        %1313 = vmatpush1.msra.mxu0 %v1287
        %1314 = vmatprep.subr.mxu0 0.0
        %1315 = vmatpush1.msra.mxu0 %v1286
        %1316 = vmatprep.subr.mxu0 0.0
        %1317 = vmatpush1.msra.mxu0 %v1285
        %1318 = vmatprep.subr.mxu0 0.0
        %1319 = vmatpush1.msra.mxu0 %v1284
        %1320 = vmatprep.subr.mxu0 0.0
        %1321 = vmatpush1.msra.mxu0 %v1283
        %1322 = vmatprep.subr.mxu0 0.0
        %1323 = vmatpush1.msra.mxu0 %v1282
        %1324 = vmatprep.subr.mxu0 0.0
        %1325 = vmatpush1.msra.mxu0 %v1281
        %1326 = vmatprep.subr.mxu0 0.0
        %1327 = vmatpush1.msra.mxu0 %v1280
        %1328 = vmatprep.subr.mxu0 0.0
        %1329 = vmatpush2.msra.mxu0 0.0
        %1330 = vmatprep.subr.mxu0 0.0
        %1331 = vmatpush2.msra.mxu0 0.0
        %1332 = vmatprep.subr.mxu0 0.0
        %1333 = vmatpush2.msra.mxu0 0.0
        %1334 = vmatprep.subr.mxu0 0.0
        %1335 = vmatpush2.msra.mxu0 0.0
        %1336 = vmatprep.subr.mxu0 0.0
        %1337 = vmatpush2.msra.mxu0 0.0
        %1338 = vmatprep.subr.mxu0 0.0
        %1339 = vmatpush2.msra.mxu0 0.0
        %1340 = vmatprep.subr.mxu0 0.0
        %1341 = vmatpush2.msra.mxu0 0.0
        %1342 = vmatprep.subr.mxu0 0.0
        %1343 = vmatpush2.msra.mxu0 0.0
        %1344 = vmatprep.subr.mxu0 0.0
        %1345 = vmatpush2.msra.mxu0 0.0
        %1346 = vmatprep.subr.mxu0 0.0
        %1347 = vmatpush2.msra.mxu0 0.0
        %1348 = vmatprep.subr.mxu0 0.0
        %1349 = vmatpush2.msra.mxu0 0.0
        %1350 = vmatprep.subr.mxu0 0.0
        %1351 = vmatpush2.msra.mxu0 0.0
        %1352 = vmatprep.subr.mxu0 0.0
        %1353 = vmatpush2.msra.mxu0 0.0
        %1354 = vmatprep.subr.mxu0 0.0
        %1355 = vmatpush2.msra.mxu0 0.0
        %1356 = vmatprep.subr.mxu0 0.0
        %1357 = vmatpush2.msra.mxu0 0.0
        %1358 = vmatprep.subr.mxu0 0.0
        %1359 = vmatpush2.msra.mxu0 0.0
        %1360 = vmatprep.mubr.f32.mxu0 0.0
        %1361 = vmatmul.mubr.f32.gmra.mxu0 %v1277
        %v1362 = vpop.f32.mrf.mxu0
        %v1363 = vadd.f32 0.0, %v1362
        %v1364 = vpop.f32.mrf.mxu0
        %1365 = vmatprep.mubr.f32.mxu0 0.0
        %1366 = vmatmul.mubr.f32.gmra.mxu0 %v1278
        %v1367 = vpop.f32.mrf.mxu0
        %v1368 = vadd.f32 0.0, %v1367
        %v1369 = vpop.f32.mrf.mxu0
        %1370 = vdwg.mxu0
        %1371 = vmatprep.subr.mxu0 0.0
        %1372 = vmatpush1.msra.mxu0 %v1276
        %1373 = vmatprep.subr.mxu0 0.0
        %1374 = vmatpush1.msra.mxu0 %v1275
        %1375 = vmatprep.subr.mxu0 0.0
        %1376 = vmatpush1.msra.mxu0 %v1274
        %1377 = vmatprep.subr.mxu0 0.0
        %1378 = vmatpush1.msra.mxu0 %v1273
        %1379 = vmatprep.subr.mxu0 0.0
        %1380 = vmatpush1.msra.mxu0 %v1272
        %1381 = vmatprep.subr.mxu0 0.0
        %1382 = vmatpush1.msra.mxu0 %v1271
        %1383 = vmatprep.subr.mxu0 0.0
        %1384 = vmatpush1.msra.mxu0 %v1270
        %1385 = vmatprep.subr.mxu0 0.0
        %1386 = vmatpush1.msra.mxu0 %v1269
        %1387 = vmatprep.subr.mxu0 0.0
        %1388 = vmatpush1.msra.mxu0 %v1268
        %1389 = vmatprep.subr.mxu0 0.0
        %1390 = vmatpush1.msra.mxu0 %v1267
        %1391 = vmatprep.subr.mxu0 0.0
        %1392 = vmatpush1.msra.mxu0 %v1266
        %1393 = vmatprep.subr.mxu0 0.0
        %1394 = vmatpush1.msra.mxu0 %v1265
        %1395 = vmatprep.subr.mxu0 0.0
        %1396 = vmatpush1.msra.mxu0 %v1264
        %1397 = vmatprep.subr.mxu0 0.0
        %1398 = vmatpush1.msra.mxu0 %v1263
        %1399 = vmatprep.subr.mxu0 0.0
        %1400 = vmatpush1.msra.mxu0 %v1262
        %1401 = vmatprep.subr.mxu0 0.0
        %1402 = vmatpush1.msra.mxu0 %v1261
        %1403 = vmatprep.subr.mxu0 0.0
        %1404 = vmatpush2.msra.mxu0 0.0
        %1405 = vmatprep.subr.mxu0 0.0
        %1406 = vmatpush2.msra.mxu0 0.0
        %1407 = vmatprep.subr.mxu0 0.0
        %1408 = vmatpush2.msra.mxu0 0.0
        %1409 = vmatprep.subr.mxu0 0.0
        %1410 = vmatpush2.msra.mxu0 0.0
        %1411 = vmatprep.subr.mxu0 0.0
        %1412 = vmatpush2.msra.mxu0 0.0
        %1413 = vmatprep.subr.mxu0 0.0
        %1414 = vmatpush2.msra.mxu0 0.0
        %1415 = vmatprep.subr.mxu0 0.0
        %1416 = vmatpush2.msra.mxu0 0.0
        %1417 = vmatprep.subr.mxu0 0.0
        %1418 = vmatpush2.msra.mxu0 0.0
        %1419 = vmatprep.subr.mxu0 0.0
        %1420 = vmatpush2.msra.mxu0 0.0
        %1421 = vmatprep.subr.mxu0 0.0
        %1422 = vmatpush2.msra.mxu0 0.0
        %1423 = vmatprep.subr.mxu0 0.0
        %1424 = vmatpush2.msra.mxu0 0.0
        %1425 = vmatprep.subr.mxu0 0.0
        %1426 = vmatpush2.msra.mxu0 0.0
        %1427 = vmatprep.subr.mxu0 0.0
        %1428 = vmatpush2.msra.mxu0 0.0
        %1429 = vmatprep.subr.mxu0 0.0
        %1430 = vmatpush2.msra.mxu0 0.0
        %1431 = vmatprep.subr.mxu0 0.0
        %1432 = vmatpush2.msra.mxu0 0.0
        %1433 = vmatprep.subr.mxu0 0.0
        %1434 = vmatpush2.msra.mxu0 0.0
        %1435 = vmatprep.mubr.f32.mxu0 0.0
        %1436 = vmatmul.mubr.f32.gmra.mxu0 %v1256
        %v1437 = vpop.f32.mrf.mxu0
        %v1438 = vadd.f32 %v1363, %v1437
        %v1439 = vpop.f32.mrf.mxu0
        %1440 = vmatprep.mubr.f32.mxu0 0.0
        %1441 = vmatmul.mubr.f32.gmra.mxu0 %v1257
        %v1442 = vpop.f32.mrf.mxu0
        %v1443 = vadd.f32 %v1368, %v1442
        %v1444 = vpop.f32.mrf.mxu0
        %1445 = vdwg.mxu0
        %v1446 = vld [vmem:[#allocation2 + $0x2] sm:$0xff]
        %v1447 = vld [vmem:[#allocation2 + $0xa] sm:$0xff]
        %s1448 = scalar_lea.vmem %s3, 1408
        %v1449 = vld [vmem:[%s1448] sm:$0xff]
        %v1450 = vld [vmem:[%s1448 + $0x8] sm:$0xff]
        %v1451 = vld [vmem:[%s1448 + $0x10] sm:$0xff]
        %v1452 = vld [vmem:[%s1448 + $0x18] sm:$0xff]
        %v1453 = vld [vmem:[%s1448 + $0x20] sm:$0xff]
        %v1454 = vld [vmem:[%s1448 + $0x28] sm:$0xff]
        %v1455 = vld [vmem:[%s1448 + $0x30] sm:$0xff]
        %v1456 = vld [vmem:[%s1448 + $0x38] sm:$0xff]
        %v1457 = vld [vmem:[%s1448 + $0x40] sm:$0xff]
        %v1458 = vld [vmem:[%s1448 + $0x48] sm:$0xff]
        %v1459 = vld [vmem:[%s1448 + $0x50] sm:$0xff]
        %v1460 = vld [vmem:[%s1448 + $0x58] sm:$0xff]
        %v1461 = vld [vmem:[%s1448 + $0x60] sm:$0xff]
        %v1462 = vld [vmem:[%s1448 + $0x68] sm:$0xff]
        %v1463 = vld [vmem:[%s1448 + $0x70] sm:$0xff]
        %v1464 = vld [vmem:[%s1448 + $0x78] sm:$0xff]
        %1465 = vmatprep.subr.mxu0 0.0
        %1466 = vmatpush1.msra.mxu0 %v1464
        %1467 = vmatprep.subr.mxu0 0.0
        %1468 = vmatpush1.msra.mxu0 %v1463
        %1469 = vmatprep.subr.mxu0 0.0
        %1470 = vmatpush1.msra.mxu0 %v1462
        %1471 = vmatprep.subr.mxu0 0.0
        %1472 = vmatpush1.msra.mxu0 %v1461
        %1473 = vmatprep.subr.mxu0 0.0
        %1474 = vmatpush1.msra.mxu0 %v1460
        %1475 = vmatprep.subr.mxu0 0.0
        %1476 = vmatpush1.msra.mxu0 %v1459
        %1477 = vmatprep.subr.mxu0 0.0
        %1478 = vmatpush1.msra.mxu0 %v1458
        %1479 = vmatprep.subr.mxu0 0.0
        %1480 = vmatpush1.msra.mxu0 %v1457
        %1481 = vmatprep.subr.mxu0 0.0
        %1482 = vmatpush1.msra.mxu0 %v1456
        %1483 = vmatprep.subr.mxu0 0.0
        %1484 = vmatpush1.msra.mxu0 %v1455
        %1485 = vmatprep.subr.mxu0 0.0
        %1486 = vmatpush1.msra.mxu0 %v1454
        %1487 = vmatprep.subr.mxu0 0.0
        %1488 = vmatpush1.msra.mxu0 %v1453
        %1489 = vmatprep.subr.mxu0 0.0
        %1490 = vmatpush1.msra.mxu0 %v1452
        %1491 = vmatprep.subr.mxu0 0.0
        %1492 = vmatpush1.msra.mxu0 %v1451
        %1493 = vmatprep.subr.mxu0 0.0
        %1494 = vmatpush1.msra.mxu0 %v1450
        %1495 = vmatprep.subr.mxu0 0.0
        %1496 = vmatpush1.msra.mxu0 %v1449
        %1497 = vmatprep.subr.mxu0 0.0
        %1498 = vmatpush2.msra.mxu0 0.0
        %1499 = vmatprep.subr.mxu0 0.0
        %1500 = vmatpush2.msra.mxu0 0.0
        %1501 = vmatprep.subr.mxu0 0.0
        %1502 = vmatpush2.msra.mxu0 0.0
        %1503 = vmatprep.subr.mxu0 0.0
        %1504 = vmatpush2.msra.mxu0 0.0
        %1505 = vmatprep.subr.mxu0 0.0
        %1506 = vmatpush2.msra.mxu0 0.0
        %1507 = vmatprep.subr.mxu0 0.0
        %1508 = vmatpush2.msra.mxu0 0.0
        %1509 = vmatprep.subr.mxu0 0.0
        %1510 = vmatpush2.msra.mxu0 0.0
        %1511 = vmatprep.subr.mxu0 0.0
        %1512 = vmatpush2.msra.mxu0 0.0
        %1513 = vmatprep.subr.mxu0 0.0
        %1514 = vmatpush2.msra.mxu0 0.0
        %1515 = vmatprep.subr.mxu0 0.0
        %1516 = vmatpush2.msra.mxu0 0.0
        %1517 = vmatprep.subr.mxu0 0.0
        %1518 = vmatpush2.msra.mxu0 0.0
        %1519 = vmatprep.subr.mxu0 0.0
        %1520 = vmatpush2.msra.mxu0 0.0
        %1521 = vmatprep.subr.mxu0 0.0
        %1522 = vmatpush2.msra.mxu0 0.0
        %1523 = vmatprep.subr.mxu0 0.0
        %1524 = vmatpush2.msra.mxu0 0.0
        %1525 = vmatprep.subr.mxu0 0.0
        %1526 = vmatpush2.msra.mxu0 0.0
        %1527 = vmatprep.subr.mxu0 0.0
        %1528 = vmatpush2.msra.mxu0 0.0
        %1529 = vmatprep.mubr.f32.mxu0 0.0
        %1530 = vmatmul.mubr.f32.gmra.mxu0 %v1446
        %v1531 = vpop.f32.mrf.mxu0
        %v1532 = vadd.f32 0.0, %v1531
        %v1533 = vpop.f32.mrf.mxu0
        %1534 = vmatprep.mubr.f32.mxu0 0.0
        %1535 = vmatmul.mubr.f32.gmra.mxu0 %v1447
        %v1536 = vpop.f32.mrf.mxu0
        %v1537 = vadd.f32 0.0, %v1536
        %v1538 = vpop.f32.mrf.mxu0
        %1539 = vdwg.mxu0
        %v1540 = vadd.f32 %v1438, %v1532
        %v1541 = vadd.f32 %v1443, %v1537
        %s1542 = scalar_lea.vmem %s4, 3
        %v1543 = vld [vmem:[%s1542] sm:$0x1]
        %v1545 = vlaneseq
        %v1546 = vshrl.u32 %v1545, 7
        %v1547 = vsub.s32 0, %v1546
        %v1548 = vrot.slane %v1543, %v1547
        %v1550 = vadd.f32 %v1540, %v1548
        %v1551 = vadd.f32 %v1541, %v1548
        %s1552 = sld [smem:[#allocation3 + $0x1]]
        %v1553 = vstv %s1552
        %v1554 = vmul.f32 %v1553, %v1550
        %v1555 = vmul.f32 %v1553, %v1551
        %v1556 = vadd.f32 %v960, %v1554
        %v1557 = vadd.f32 %v961, %v1555
        %1558 = vst [vmem:[%s265] sm:$0xff] %v1556
        %1559 = vst [vmem:[%s265 + $0x8] sm:$0xff] %v1557
        %p1560 = scmp.lt.s32.totalorder %s18, 1
        %s1561 = scalar_select %p1560, %s18, 1
        %s1562 = smul.addr %s1561, 2
        %s1563 = smul.addr %s1562, 8
        %s1564 = scalar_lea.vmem %s6, %s1563
        // Predicated region
        $region49: #{scaling_residual_encoder_forward.1} parent=43 // pred_check
          %p1565 = pneg %p167
        $region50: #{scaling_residual_encoder_forward.1} parent=43 // pred_check_branch
          %1567 = sbr.rel (%p1565) target = $region52
        $region51: #{scaling_residual_encoder_forward.1} parent=43 // pred_region
          _
        $region52: #{scaling_residual_encoder_forward.1} parent=43 // pred_fallthru
          _
      $region44: #{scaling_residual_encoder_forward.1} parent=5 // pred_fallthru
        _
      %p1568 = scmp.le.s32.totalorder 2, %s13
      // Predicated region
      $region53: #{scaling_residual_encoder_forward.1} parent=5 // pred_check
        %p1569 = pneg %p1568
      $region54: #{scaling_residual_encoder_forward.1} parent=5 // pred_check_branch
        %1571 = sbr.rel (%p1569) target = $region56
      $region55: #{scaling_residual_encoder_forward.1} parent=5 // pred_region
        %s1572 = ssub.s32 %s13, 2
        // Predicated region
        $region57: #{scaling_residual_encoder_forward.1} parent=55 // pred_check
          %p1573 = pneg %p173
        $region58: #{scaling_residual_encoder_forward.1} parent=55 // pred_check_branch
          %1575 = sbr.rel (%p1573) target = $region60
        $region59: #{scaling_residual_encoder_forward.1} parent=55 // pred_region
          %p1576 = scmp.lt.s32.totalorder %s19, 1
          %s1577 = scalar_select %p1576, %s19, 1
          %s1578 = smul.addr %s1577, 2
          %s1579 = smul.addr %s1578, 8
          %s1580 = scalar_lea.vmem %s6, %s1579
        $region60: #{scaling_residual_encoder_forward.1} parent=55 // pred_fallthru
          _
      $region56: #{scaling_residual_encoder_forward.1} parent=5 // pred_fallthru
        _
    $region6: #{scaling_residual_encoder_forward.1} parent=1 // loop_footer
      %s17 = sadd.s32 1, %s13
    $region7: #{scaling_residual_encoder_forward.1} parent=1 // loop_footer_branch
      %12 = sbr.rel target = $region3
    $region8: #{scaling_residual_encoder_forward.1} parent=1 // loop_exit
      _
    %1581 = vsyncpa [#allocation4], 1
    %s1582 = scalar_lea.sflag [#allocation4], 1
    %1583 = vsyncpa %s1582, 1

</llo_original>
